<compile_context>
chip_gen: v7x
topology: tpu7x:2x2x1
jax: 0.10.0
libtpu: 0.0.40
codegen_flags: <defaults>
</compile_context>

<pallas_src>
import functools

import jax
import jax.numpy as jnp
from jax.experimental import pallas as pl
from jax.experimental.pallas import tpu as pltpu


PAD = 128          # lane padding for narrow layers; output slab width
TB_MAX = 256       # batch tile (sweep 256/512); matches 256-row MXU geometry on v6e/v7x


def _round_up(x, m):
    return ((x + m - 1) // m) * m


def _pick_batch_tile(batch):
    """Batch tile: big enough to amortize step overhead, >=2 grid steps when possible."""
    tb = min(TB_MAX, _round_up(max(batch, 1), 8))
    # Ensure at least 2 parallel grid steps (v7x has 2 TensorCores sharing the grid).
    if tb >= 16 and _round_up(batch, tb) // tb < 2:
        tb = _round_up((batch + 1) // 2, 8)
    return tb


def _device_flags():
    """(activation dtype, fuse small layers) — bf16 EUP + 256-wide MXU only on v6e/v7x."""
    try:
        kind = jax.devices()[0].device_kind.lower()
    except Exception:  # pragma: no cover - defensive fallback
        kind = ""
    modern = any(tag in kind for tag in ("v6", "v7"))
    return (jnp.bfloat16 if modern else jnp.float32), modern


# ---------------------------------------------------------------------------
# Pallas kernel: fused actor + critic forward pass (one batch tile per step)
# ---------------------------------------------------------------------------
def actor_critic_kernel(
    x_ref,                                      # [TB, S_pad]  f32
    w1_ref, w2_ref, w3_ref, w4_ref, w5_ref,     # packed bf16 weight slabs
    b_ref,                                      # [1, 2304]    f32 packed biases
    out_ref,                                    # [TB, 128]    f32 (logp | value@lane127)
    *, action_dim, act_dtype, fuse_small,
):
    def layer(h, w, b):
        pre = jnp.dot(h, w, preferred_element_type=jnp.float32) + b
        # tanh on EUP in bf16 on v6e/v7x, f32 on v5e; next matmul input is bf16 either way
        return jnp.tanh(pre.astype(act_dtype)).astype(jnp.bfloat16)

    def head(h, w, b):
        return jnp.dot(h, w, preferred_element_type=jnp.float32) + b

    x = x_ref[...].astype(jnp.bfloat16)

    # ---- layer 1 (shared input, fused): [TB, 1024] = [actor 512 | critic 512]
    h1 = layer(x, w1_ref[...], b_ref[:, 0:1024])
    ha, hc = h1[:, 0:512], h1[:, 512:1024]

    # ---- layer 2: 512 -> 256 per branch (N=256 already fills a 256-wide MXU)
    ha = layer(ha, w2_ref[:, 0:256], b_ref[:, 1024:1280])
    hc = layer(hc, w2_ref[:, 256:512], b_ref[:, 1280:1536])

    if fuse_small:
        # v6e/v7x: one full-width block-diagonal matmul per narrow layer.
        h = jnp.concatenate([ha, hc], axis=1)                  # [TB, 512]
        h = layer(h, w3_ref[...], b_ref[:, 1536:1792])         # [TB, 256]
        h = layer(h, w4_ref[...], b_ref[:, 1792:2048])         # [TB, 256]
        o = head(h, w5_ref[...], b_ref[:, 2048:2304])          # [TB, 256]
        logits, value = o[:, 0:PAD], o[:, PAD:2 * PAD]
    else:
        # v5e: 128-wide MXU is already full at N=128 — keep two half matmuls and
        # statically slice the diagonal blocks out of the packed slabs.
        ha = layer(ha, w3_ref[0:256, 0:PAD], b_ref[:, 1536:1664])
        hc = layer(hc, w3_ref[256:512, PAD:2 * PAD], b_ref[:, 1664:1792])
        ha = layer(ha, w4_ref[0:PAD, 0:PAD], b_ref[:, 1792:1920])
        hc = layer(hc, w4_ref[PAD:2 * PAD, PAD:2 * PAD], b_ref[:, 1920:2048])
        logits = head(ha, w5_ref[0:PAD, 0:PAD], b_ref[:, 2048:2176])
        value = head(hc, w5_ref[PAD:2 * PAD, PAD:2 * PAD], b_ref[:, 2176:2304])

    # ---- masked log-softmax over the first `action_dim` lanes (f32 sum / log)
    lane = jax.lax.broadcasted_iota(jnp.int32, logits.shape, 1)
    valid = lane < action_dim
    masked = jnp.where(valid, logits, jnp.float32(-1e30))
    m = jnp.max(masked, axis=-1, keepdims=True)
    e = jnp.exp((masked - m).astype(act_dtype)).astype(jnp.float32)
    e = jnp.where(valid, e, 0.0)
    s = jnp.sum(e, axis=-1, keepdims=True)
    logp = masked - (m + jnp.log(s))

    # Single lane-dense output slab: log-probs, with the critic value packed in lane 127.
    out_ref[...] = jnp.where(lane == PAD - 1, value[:, 0:1], logp)


# ---------------------------------------------------------------------------
# Wrapper: batch grid + single lane-dense output, slices real columns back out
# ---------------------------------------------------------------------------
@functools.partial(jax.jit, static_argnames=("action_dim",))
def actor_critic_forward(state, packed, *, action_dim):
    """Returns (action_probs [B, A], log_probs [B, A], state_values [B, 1])."""
    B, S = state.shape
    if not (0 < action_dim < PAD):
        raise ValueError(f"action_dim must be in [1, {PAD - 1}], got {action_dim}")

    S_pad = packed["w1"].shape[0]
    if S_pad < S:
        raise ValueError("packed params were built for a smaller state_dim")

    TB = _pick_batch_tile(B)
    B_pad = _round_up(B, TB)
    x = state
    if (B_pad != B) or (S_pad != S):
        x = jnp.pad(state, ((0, B_pad - B), (0, S_pad - S)))

    act_dtype, fuse_small = _device_flags()

    row_map = lambda i: (i, 0)
    const_map = lambda i: (0, 0)

    out_p = pl.pallas_call(
        functools.partial(actor_critic_kernel, action_dim=action_dim,
                          act_dtype=act_dtype, fuse_small=fuse_small),
        out_shape=jax.ShapeDtypeStruct((B_pad, PAD), jnp.float32),
        grid=(B_pad // TB,),
        in_specs=[
            pl.BlockSpec((TB, S_pad), row_map),              # x (tiled over batch)
            pl.BlockSpec(packed["w1"].shape, const_map),     # weights: fetched once
            pl.BlockSpec(packed["w2"].shape, const_map),
            pl.BlockSpec(packed["w3"].shape, const_map),
            pl.BlockSpec(packed["w4"].shape, const_map),
            pl.BlockSpec(packed["w5"].shape, const_map),
            pl.BlockSpec(packed["b"].shape, const_map),
        ],
        out_specs=pl.BlockSpec((TB, PAD), row_map),
        compiler_params=pltpu.CompilerParams(
            dimension_semantics=("parallel",),
        ),
    )(x, packed["w1"], packed["w2"], packed["w3"], packed["w4"], packed["w5"],
      packed["b"])

    logp = out_p[:B, :action_dim]
    value = out_p[:B, PAD - 1:PAD]
    probs = jnp.exp(logp)        # exactly normalized; replaces in-kernel probs output
    return probs, logp, value


# ---------------------------------------------------------------------------
# Parameter init (mimics nn.Linear default U(-1/sqrt(fan_in), +1/sqrt(fan_in)))
# Weights stored [fan_in, fan_out] (transposed vs. PyTorch's nn.Linear.weight).
# ---------------------------------------------------------------------------
def _init_linear(key, fan_in, fan_out):
    kw, kb = jax.random.split(key)
    bound = 1.0 / float(fan_in) ** 0.5
    w = jax.random.uniform(kw, (fan_in, fan_out), jnp.float32, -bound, bound)
    b = jax.random.uniform(kb, (fan_out,), jnp.float32, -bound, bound)
    return w, b


def init_actor_critic_params(key, state_dim, action_dim):
    actor_dims = [(state_dim, 512), (512, 256), (256, 64), (64, 64), (64, action_dim)]
    critic_dims = [(state_dim, 512), (512, 256), (256, 128), (128, 64), (64, 1)]
    keys = jax.random.split(key, len(actor_dims) + len(critic_dims))
    actor = [_init_linear(k, fi, fo) for k, (fi, fo) in zip(keys[:5], actor_dims)]
    critic = [_init_linear(k, fi, fo) for k, (fi, fo) in zip(keys[5:], critic_dims)]
    return {"actor": actor, "critic": critic}


# ---------------------------------------------------------------------------
# Pack per-layer params: bf16 weight slabs (block-diagonal for layers 3-5)
# + one f32 bias slab.  state_dim is padded up to a multiple of 16.
# ---------------------------------------------------------------------------
def pack_actor_critic_params(params):
    (aw1, ab1), (aw2, ab2), (aw3, ab3), (aw4, ab4), (aw5, ab5) = params["actor"]
    (cw1, cb1), (cw2, cb2), (cw3, cb3), (cw4, cb4), (cw5, cb5) = params["critic"]

    if aw5.shape[1] >= PAD:
        raise ValueError(f"action_dim must be < {PAD}")

    def pad2(w, rows, cols):
        return jnp.pad(w, ((0, rows - w.shape[0]), (0, cols - w.shape[1])))

    def pad1(b, cols):
        return jnp.pad(b, (0, cols - b.shape[0]))

    def block_diag(a, c, k, n=PAD):
        top = jnp.concatenate([pad2(a, k, n), jnp.zeros((k, n), a.dtype)], axis=1)
        bot = jnp.concatenate([jnp.zeros((k, n), c.dtype), pad2(c, k, n)], axis=1)
        return jnp.concatenate([top, bot], axis=0)

    S = aw1.shape[0]
    S_pad = _round_up(S, 16)   # keep bf16 w1 sublane-packed for awkward state dims

    w1 = pad2(jnp.concatenate([aw1, cw1], axis=1), S_pad, 1024)   # [S_pad, 1024]
    w2 = jnp.concatenate([aw2, cw2], axis=1)                      # [512, 512]
    w3 = block_diag(aw3, cw3, 256)                                # [512, 256]
    w4 = block_diag(aw4, cw4, PAD)                                # [256, 256]
    w5 = block_diag(aw5, cw5, PAD)                                # [256, 256]

    b = jnp.concatenate([
        ab1, cb1,                               # [0    : 1024)
        ab2, cb2,                               # [1024 : 1536)
        pad1(ab3, PAD), cb3,                    # [1536 : 1792)
        pad1(ab4, PAD), pad1(cb4, PAD),         # [1792 : 2048)
        pad1(ab5, PAD), pad1(cb5, PAD),         # [2048 : 2304)
    ]).reshape(1, -1).astype(jnp.float32)

    return {
        "w1": w1.astype(jnp.bfloat16),
        "w2": w2.astype(jnp.bfloat16),
        "w3": w3.astype(jnp.bfloat16),
        "w4": w4.astype(jnp.bfloat16),
        "w5": w5.astype(jnp.bfloat16),
        "b": b,
    }


# ---------------------------------------------------------------------------
# act / evaluate (Categorical distribution glue in plain JAX, on log-probs)
# ---------------------------------------------------------------------------
def act(packed, state, key, *, action_dim):
    probs, logp, value = actor_critic_forward(state, packed, action_dim=action_dim)
    # Gumbel-max categorical sampling (equivalent to Categorical(probs).sample()).
    g = -jnp.log(-jnp.log(jax.random.uniform(key, logp.shape) + 1e-20) + 1e-20)
    action = jnp.argmax(logp + g, axis=-1)
    action_logprob = jnp.take_along_axis(logp, action[:, None], axis=-1)[:, 0]
    return action, action_logprob, value


def evaluate(packed, state, action, *, action_dim):
    probs, logp, value = actor_critic_forward(state, packed, action_dim=action_dim)
    action_logprobs = jnp.take_along_axis(logp, action[:, None], axis=-1)[:, 0]
    dist_entropy = -jnp.sum(probs * logp, axis=-1)
    return action_logprobs, value, dist_entropy


# ---------------------------------------------------------------------------
# Pure-JAX f32 reference (module semantics)
# ---------------------------------------------------------------------------
def _reference_forward(state, params):
    def trunk(x, layers):
        h = x
        for w, b in layers[:-1]:
            h = jnp.tanh(h @ w + b)
        w, b = layers[-1]
        return h @ w + b

    logits = trunk(state, params["actor"])
    probs = jax.nn.softmax(logits, axis=-1)
    logp = jax.nn.log_softmax(logits, axis=-1)
    value = trunk(state, params["critic"])
    return probs, logp, value


if __name__ == "__main__":
    B, STATE_DIM, ACTION_DIM = 8, 16, 8

    root = jax.random.PRNGKey(0)
    k_params, k_state, k_sample, k_state2 = jax.random.split(root, 4)

    params = init_actor_critic_params(k_params, STATE_DIM, ACTION_DIM)
    packed = pack_actor_critic_params(params)
    state = jax.random.normal(k_state, (B, STATE_DIM), jnp.float32)

    # Kernel forward pass (small batch)
    probs, logp, value = actor_critic_forward(state, packed, action_dim=ACTION_DIM)
    jax.block_until_ready((probs, logp, value))

    ref_probs, ref_logp, ref_value = _reference_forward(state, params)
    assert probs.shape == (B, ACTION_DIM) and logp.shape == (B, ACTION_DIM)
    assert value.shape == (B, 1)
    assert jnp.allclose(probs, ref_probs, atol=2e-2, rtol=2e-2)
    assert jnp.allclose(logp, ref_logp, atol=2e-2, rtol=2e-2)
    assert jnp.allclose(value, ref_value, atol=2e-2, rtol=2e-2)
    assert jnp.allclose(jnp.sum(probs, axis=-1), 1.0, atol=1e-3)

    # Larger, non-multiple batch exercises the multi-step batch grid + padding path
    B2 = 200
    state2 = jax.random.normal(k_state2, (B2, STATE_DIM), jnp.float32)
    probs2, logp2, value2 = actor_critic_forward(state2, packed, action_dim=ACTION_DIM)
    jax.block_until_ready((probs2, logp2, value2))
    ref_probs2, ref_logp2, ref_value2 = _reference_forward(state2, params)
    assert probs2.shape == (B2, ACTION_DIM) and value2.shape == (B2, 1)
    assert jnp.allclose(probs2, ref_probs2, atol=2e-2, rtol=2e-2)
    assert jnp.allclose(logp2, ref_logp2, atol=2e-2, rtol=2e-2)
    assert jnp.allclose(value2, ref_value2, atol=2e-2, rtol=2e-2)

    # act / evaluate paths (distribution glue on top of kernel outputs)
    action, action_logprob, state_val = act(packed, state, k_sample,
                                            action_dim=ACTION_DIM)
    jax.block_until_ready((action, action_logprob, state_val))

    logps, vals, entropy = evaluate(packed, state, action, action_dim=ACTION_DIM)
    jax.block_until_ready((logps, vals, entropy))

    assert action.shape == (B,) and action_logprob.shape == (B,)
    assert state_val.shape == (B, 1) and entropy.shape == (B,)
    assert not bool(jnp.any(jnp.isnan(entropy)))

    print("KERNEL_OK")
</pallas_src>

<mosaic_0001>
module attributes {stable_mosaic.version = 11 : i64} {
  func.func @actor_critic_kernel(%arg0: i32, %arg1: memref<8x16xf32, #tpu.memory_space<vmem>>, %arg2: memref<16x1024xbf16, #tpu.memory_space<vmem>>, %arg3: memref<512x512xbf16, #tpu.memory_space<vmem>>, %arg4: memref<512x256xbf16, #tpu.memory_space<vmem>>, %arg5: memref<256x256xbf16, #tpu.memory_space<vmem>>, %arg6: memref<256x256xbf16, #tpu.memory_space<vmem>>, %arg7: memref<1x2304xf32, #tpu.memory_space<vmem>>, %arg8: memref<8x128xf32, #tpu.memory_space<vmem>>) attributes {dimension_semantics = [#tpu.dimension_semantics<parallel>], iteration_bounds = array<i64: 1>, scalar_prefetch = 0 : i64, scratch_operands = 0 : i64, tpu.core_type = #tpu.core_type<tc>, window_params = [{transform_indices = @transform_0, window_bounds = array<i64: 8, 16>}, {pipeline_mode = #tpu.pipeline_mode<synchronous>, transform_indices = @transform_1, window_bounds = array<i64: 16, 1024>}, {pipeline_mode = #tpu.pipeline_mode<synchronous>, transform_indices = @transform_2, window_bounds = array<i64: 512, 512>}, {pipeline_mode = #tpu.pipeline_mode<synchronous>, transform_indices = @transform_3, window_bounds = array<i64: 512, 256>}, {pipeline_mode = #tpu.pipeline_mode<synchronous>, transform_indices = @transform_4, window_bounds = array<i64: 256, 256>}, {pipeline_mode = #tpu.pipeline_mode<synchronous>, transform_indices = @transform_5, window_bounds = array<i64: 256, 256>}, {pipeline_mode = #tpu.pipeline_mode<synchronous>, transform_indices = @transform_6, window_bounds = array<i64: 1, 2304>}, {transform_indices = @transform_7, window_bounds = array<i64: 8, 128>}]} {
    %c0 = arith.constant 0 : index
    %c0_0 = arith.constant 0 : index
    %0 = vector.load %arg1[%c0, %c0_0] : memref<8x16xf32, #tpu.memory_space<vmem>>, vector<8x16xf32>
    %1 = arith.truncf %0 : vector<8x16xf32> to vector<8x16xbf16>
    %c0_1 = arith.constant 0 : index
    %c0_2 = arith.constant 0 : index
    %2 = vector.load %arg2[%c0_1, %c0_2] : memref<16x1024xbf16, #tpu.memory_space<vmem>>, vector<16x1024xbf16>
    %c0_3 = arith.constant 0 : index
    %c0_4 = arith.constant 0 : index
    %3 = vector.load %arg7[%c0_3, %c0_4] : memref<1x2304xf32, #tpu.memory_space<vmem>>, vector<1x1024xf32>
    %cst = arith.constant dense<0.000000e+00> : vector<8x1024xf32>
    %4 = tpu.matmul %1, %2, %cst {dimension_numbers = #tpu.dot_dimension_numbers<[1], [0], [0], [1], [0, 0, 1, 1], [], []>} : vector<8x16xbf16>, vector<16x1024xbf16>, vector<8x1024xf32> -> vector<8x1024xf32>
    %5 = vector.broadcast %3 : vector<1x1024xf32> to vector<8x1024xf32>
    %6 = arith.addf %4, %5 : vector<8x1024xf32>
    %7 = math.tanh %6 : vector<8x1024xf32>
    %8 = arith.truncf %7 : vector<8x1024xf32> to vector<8x1024xbf16>
    %9 = vector.extract_strided_slice %8 {offsets = [0, 0], sizes = [8, 512], strides = [1, 1]} : vector<8x1024xbf16> to vector<8x512xbf16>
    %10 = vector.extract_strided_slice %8 {offsets = [0, 512], sizes = [8, 512], strides = [1, 1]} : vector<8x1024xbf16> to vector<8x512xbf16>
    %c0_5 = arith.constant 0 : index
    %c0_6 = arith.constant 0 : index
    %11 = vector.load %arg3[%c0_5, %c0_6] : memref<512x512xbf16, #tpu.memory_space<vmem>>, vector<512x256xbf16>
    %c0_7 = arith.constant 0 : index
    %c1024 = arith.constant 1024 : index
    %12 = vector.load %arg7[%c0_7, %c1024] : memref<1x2304xf32, #tpu.memory_space<vmem>>, vector<1x256xf32>
    %cst_8 = arith.constant dense<0.000000e+00> : vector<8x256xf32>
    %13 = tpu.matmul %9, %11, %cst_8 {dimension_numbers = #tpu.dot_dimension_numbers<[1], [0], [0], [1], [0, 0, 1, 1], [], []>} : vector<8x512xbf16>, vector<512x256xbf16>, vector<8x256xf32> -> vector<8x256xf32>
    %14 = vector.broadcast %12 : vector<1x256xf32> to vector<8x256xf32>
    %15 = arith.addf %13, %14 : vector<8x256xf32>
    %16 = math.tanh %15 : vector<8x256xf32>
    %17 = arith.truncf %16 : vector<8x256xf32> to vector<8x256xbf16>
    %c0_9 = arith.constant 0 : index
    %c256 = arith.constant 256 : index
    %18 = vector.load %arg3[%c0_9, %c256] : memref<512x512xbf16, #tpu.memory_space<vmem>>, vector<512x256xbf16>
    %c0_10 = arith.constant 0 : index
    %c1280 = arith.constant 1280 : index
    %19 = vector.load %arg7[%c0_10, %c1280] : memref<1x2304xf32, #tpu.memory_space<vmem>>, vector<1x256xf32>
    %cst_11 = arith.constant dense<0.000000e+00> : vector<8x256xf32>
    %20 = tpu.matmul %10, %18, %cst_11 {dimension_numbers = #tpu.dot_dimension_numbers<[1], [0], [0], [1], [0, 0, 1, 1], [], []>} : vector<8x512xbf16>, vector<512x256xbf16>, vector<8x256xf32> -> vector<8x256xf32>
    %21 = vector.broadcast %19 : vector<1x256xf32> to vector<8x256xf32>
    %22 = arith.addf %20, %21 : vector<8x256xf32>
    %23 = math.tanh %22 : vector<8x256xf32>
    %24 = arith.truncf %23 : vector<8x256xf32> to vector<8x256xbf16>
    %c0_12 = arith.constant 0 : index
    %c0_13 = arith.constant 0 : index
    %25 = vector.load %arg4[%c0_12, %c0_13] : memref<512x256xbf16, #tpu.memory_space<vmem>>, vector<256x128xbf16>
    %c0_14 = arith.constant 0 : index
    %c1536 = arith.constant 1536 : index
    %26 = vector.load %arg7[%c0_14, %c1536] : memref<1x2304xf32, #tpu.memory_space<vmem>>, vector<1x128xf32>
    %cst_15 = arith.constant dense<0.000000e+00> : vector<8x128xf32>
    %27 = tpu.matmul %17, %25, %cst_15 {dimension_numbers = #tpu.dot_dimension_numbers<[1], [0], [0], [1], [0, 0, 1, 1], [], []>} : vector<8x256xbf16>, vector<256x128xbf16>, vector<8x128xf32> -> vector<8x128xf32>
    %28 = vector.broadcast %26 : vector<1x128xf32> to vector<8x128xf32>
    %29 = arith.addf %27, %28 : vector<8x128xf32>
    %30 = math.tanh %29 : vector<8x128xf32>
    %31 = arith.truncf %30 : vector<8x128xf32> to vector<8x128xbf16>
    %c256_16 = arith.constant 256 : index
    %c128 = arith.constant 128 : index
    %32 = vector.load %arg4[%c256_16, %c128] : memref<512x256xbf16, #tpu.memory_space<vmem>>, vector<256x128xbf16>
    %c0_17 = arith.constant 0 : index
    %c1664 = arith.constant 1664 : index
    %33 = vector.load %arg7[%c0_17, %c1664] : memref<1x2304xf32, #tpu.memory_space<vmem>>, vector<1x128xf32>
    %cst_18 = arith.constant dense<0.000000e+00> : vector<8x128xf32>
    %34 = tpu.matmul %24, %32, %cst_18 {dimension_numbers = #tpu.dot_dimension_numbers<[1], [0], [0], [1], [0, 0, 1, 1], [], []>} : vector<8x256xbf16>, vector<256x128xbf16>, vector<8x128xf32> -> vector<8x128xf32>
    %35 = vector.broadcast %33 : vector<1x128xf32> to vector<8x128xf32>
    %36 = arith.addf %34, %35 : vector<8x128xf32>
    %37 = math.tanh %36 : vector<8x128xf32>
    %38 = arith.truncf %37 : vector<8x128xf32> to vector<8x128xbf16>
    %c0_19 = arith.constant 0 : index
    %c0_20 = arith.constant 0 : index
    %39 = vector.load %arg5[%c0_19, %c0_20] : memref<256x256xbf16, #tpu.memory_space<vmem>>, vector<128x128xbf16>
    %c0_21 = arith.constant 0 : index
    %c1792 = arith.constant 1792 : index
    %40 = vector.load %arg7[%c0_21, %c1792] : memref<1x2304xf32, #tpu.memory_space<vmem>>, vector<1x128xf32>
    %cst_22 = arith.constant dense<0.000000e+00> : vector<8x128xf32>
    %41 = tpu.matmul %31, %39, %cst_22 {dimension_numbers = #tpu.dot_dimension_numbers<[1], [0], [0], [1], [0, 0, 1, 1], [], []>} : vector<8x128xbf16>, vector<128x128xbf16>, vector<8x128xf32> -> vector<8x128xf32>
    %42 = vector.broadcast %40 : vector<1x128xf32> to vector<8x128xf32>
    %43 = arith.addf %41, %42 : vector<8x128xf32>
    %44 = math.tanh %43 : vector<8x128xf32>
    %45 = arith.truncf %44 : vector<8x128xf32> to vector<8x128xbf16>
    %c128_23 = arith.constant 128 : index
    %c128_24 = arith.constant 128 : index
    %46 = vector.load %arg5[%c128_23, %c128_24] : memref<256x256xbf16, #tpu.memory_space<vmem>>, vector<128x128xbf16>
    %c0_25 = arith.constant 0 : index
    %c1920 = arith.constant 1920 : index
    %47 = vector.load %arg7[%c0_25, %c1920] : memref<1x2304xf32, #tpu.memory_space<vmem>>, vector<1x128xf32>
    %cst_26 = arith.constant dense<0.000000e+00> : vector<8x128xf32>
    %48 = tpu.matmul %38, %46, %cst_26 {dimension_numbers = #tpu.dot_dimension_numbers<[1], [0], [0], [1], [0, 0, 1, 1], [], []>} : vector<8x128xbf16>, vector<128x128xbf16>, vector<8x128xf32> -> vector<8x128xf32>
    %49 = vector.broadcast %47 : vector<1x128xf32> to vector<8x128xf32>
    %50 = arith.addf %48, %49 : vector<8x128xf32>
    %51 = math.tanh %50 : vector<8x128xf32>
    %52 = arith.truncf %51 : vector<8x128xf32> to vector<8x128xbf16>
    %c0_27 = arith.constant 0 : index
    %c0_28 = arith.constant 0 : index
    %53 = vector.load %arg6[%c0_27, %c0_28] : memref<256x256xbf16, #tpu.memory_space<vmem>>, vector<128x128xbf16>
    %c0_29 = arith.constant 0 : index
    %c2048 = arith.constant 2048 : index
    %54 = vector.load %arg7[%c0_29, %c2048] : memref<1x2304xf32, #tpu.memory_space<vmem>>, vector<1x128xf32>
    %cst_30 = arith.constant dense<0.000000e+00> : vector<8x128xf32>
    %55 = tpu.matmul %45, %53, %cst_30 {dimension_numbers = #tpu.dot_dimension_numbers<[1], [0], [0], [1], [0, 0, 1, 1], [], []>} : vector<8x128xbf16>, vector<128x128xbf16>, vector<8x128xf32> -> vector<8x128xf32>
    %56 = vector.broadcast %54 : vector<1x128xf32> to vector<8x128xf32>
    %57 = arith.addf %55, %56 : vector<8x128xf32>
    %c128_31 = arith.constant 128 : index
    %c128_32 = arith.constant 128 : index
    %58 = vector.load %arg6[%c128_31, %c128_32] : memref<256x256xbf16, #tpu.memory_space<vmem>>, vector<128x128xbf16>
    %c0_33 = arith.constant 0 : index
    %c2176 = arith.constant 2176 : index
    %59 = vector.load %arg7[%c0_33, %c2176] : memref<1x2304xf32, #tpu.memory_space<vmem>>, vector<1x128xf32>
    %cst_34 = arith.constant dense<0.000000e+00> : vector<8x128xf32>
    %60 = tpu.matmul %52, %58, %cst_34 {dimension_numbers = #tpu.dot_dimension_numbers<[1], [0], [0], [1], [0, 0, 1, 1], [], []>} : vector<8x128xbf16>, vector<128x128xbf16>, vector<8x128xf32> -> vector<8x128xf32>
    %61 = vector.broadcast %59 : vector<1x128xf32> to vector<8x128xf32>
    %62 = arith.addf %60, %61 : vector<8x128xf32>
    %63 = tpu.iota {dimensions = array<i32: 1>} : vector<8x128xi32>
    %c8_i32 = arith.constant 8 : i32
    %64 = vector.broadcast %c8_i32 : i32 to vector<8x128xi32>
    %65 = arith.cmpi slt, %63, %64 : vector<8x128xi32>
    %cst_35 = arith.constant -1.000000e+30 : f32
    %66 = vector.broadcast %cst_35 : f32 to vector<8x128xf32>
    %67 = arith.select %65, %57, %66 : vector<8x128xi1>, vector<8x128xf32>
    %cst_36 = arith.constant dense<0xFF800000> : vector<8xf32>
    %68 = vector.multi_reduction <maximumf>, %67, %cst_36 [1] : vector<8x128xf32> to vector<8xf32>
    %69 = vector.shape_cast %68 : vector<8xf32> to vector<8x1xf32>
    %70 = vector.broadcast %69 : vector<8x1xf32> to vector<8x128xf32>
    %71 = arith.subf %67, %70 : vector<8x128xf32>
    %72 = math.exp %71 : vector<8x128xf32>
    %cst_37 = arith.constant 0.000000e+00 : f32
    %73 = vector.broadcast %cst_37 : f32 to vector<8x128xf32>
    %74 = arith.select %65, %72, %73 : vector<8x128xi1>, vector<8x128xf32>
    %cst_38 = arith.constant dense<0.000000e+00> : vector<8xf32>
    %75 = vector.multi_reduction <add>, %74, %cst_38 [1] : vector<8x128xf32> to vector<8xf32>
    %76 = vector.shape_cast %75 : vector<8xf32> to vector<8x1xf32>
    %77 = math.log %76 : vector<8x1xf32>
    %78 = arith.addf %69, %77 : vector<8x1xf32>
    %79 = vector.broadcast %78 : vector<8x1xf32> to vector<8x128xf32>
    %80 = arith.subf %67, %79 : vector<8x128xf32>
    %c127_i32 = arith.constant 127 : i32
    %81 = vector.broadcast %c127_i32 : i32 to vector<8x128xi32>
    %82 = arith.cmpi eq, %63, %81 : vector<8x128xi32>
    %83 = vector.extract_strided_slice %62 {offsets = [0, 0], sizes = [8, 1], strides = [1, 1]} : vector<8x128xf32> to vector<8x1xf32>
    %84 = vector.shape_cast %83 : vector<8x1xf32> to vector<8x1xf32>
    %85 = vector.broadcast %84 : vector<8x1xf32> to vector<8x128xf32>
    %86 = arith.select %82, %85, %80 : vector<8x128xi1>, vector<8x128xf32>
    %c0_39 = arith.constant 0 : index
    %c0_40 = arith.constant 0 : index
    %87 = vector.load %arg8[%c0_39, %c0_40] : memref<8x128xf32, #tpu.memory_space<vmem>>, vector<8x128xf32>
    tpu.vector_store %arg8[%c0_39, %c0_40], %86 {strides = array<i32>} : memref<8x128xf32, #tpu.memory_space<vmem>>, vector<8x128xf32>,
    return
  }
  func.func @transform_0(%arg0: i32) -> (i32, i32) {
    %c0_i32 = arith.constant 0 : i32
    %c0_i32_0 = arith.constant 0 : i32
    return %arg0, %c0_i32 : i32, i32
  }
  func.func @transform_1(%arg0: i32) -> (i32, i32) {
    %c0_i32 = arith.constant 0 : i32
    %c0_i32_0 = arith.constant 0 : i32
    %c0_i32_1 = arith.constant 0 : i32
    return %c0_i32, %c0_i32_0 : i32, i32
  }
  func.func @transform_2(%arg0: i32) -> (i32, i32) {
    %c0_i32 = arith.constant 0 : i32
    %c0_i32_0 = arith.constant 0 : i32
    %c0_i32_1 = arith.constant 0 : i32
    return %c0_i32, %c0_i32_0 : i32, i32
  }
  func.func @transform_3(%arg0: i32) -> (i32, i32) {
    %c0_i32 = arith.constant 0 : i32
    %c0_i32_0 = arith.constant 0 : i32
    %c0_i32_1 = arith.constant 0 : i32
    return %c0_i32, %c0_i32_0 : i32, i32
  }
  func.func @transform_4(%arg0: i32) -> (i32, i32) {
    %c0_i32 = arith.constant 0 : i32
    %c0_i32_0 = arith.constant 0 : i32
    %c0_i32_1 = arith.constant 0 : i32
    return %c0_i32, %c0_i32_0 : i32, i32
  }
  func.func @transform_5(%arg0: i32) -> (i32, i32) {
    %c0_i32 = arith.constant 0 : i32
    %c0_i32_0 = arith.constant 0 : i32
    %c0_i32_1 = arith.constant 0 : i32
    return %c0_i32, %c0_i32_0 : i32, i32
  }
  func.func @transform_6(%arg0: i32) -> (i32, i32) {
    %c0_i32 = arith.constant 0 : i32
    %c0_i32_0 = arith.constant 0 : i32
    %c0_i32_1 = arith.constant 0 : i32
    return %c0_i32, %c0_i32_0 : i32, i32
  }
  func.func @transform_7(%arg0: i32) -> (i32, i32) {
    %c0_i32 = arith.constant 0 : i32
    %c0_i32_0 = arith.constant 0 : i32
    return %arg0, %c0_i32 : i32, i32
  }
}

</mosaic_0001>

<llo_original>
// kernel: actor_critic_forward.1
$region0: #{actor_critic_forward.1}
  #allocation0 [shape = 'u32[]', space=smem, size = 0x4, offset = 0x4, fixed_abs, tag = 'smem constant byte address 0x4 - core index']
  #allocation1 [shape = 'u32[144,128]{1,0:T(1,128)}', space=vmem, size = 0x12000, scoped, tag = 'internal scratch']
  %s0 = inlined_call_operand.hbm [shape: f32[8,16], index: 0, kind: input, shape index: {}]
  %s1 = inlined_call_operand.hbm [shape: bf16[16,1024], index: 1, kind: input, shape index: {}]
  %s2 = inlined_call_operand.hbm [shape: bf16[512,512], index: 2, kind: input, shape index: {}]
  %s3 = inlined_call_operand.hbm [shape: bf16[512,256], index: 3, kind: input, shape index: {}]
  %s4 = inlined_call_operand.hbm [shape: bf16[256,256], index: 4, kind: input, shape index: {}]
  %s5 = inlined_call_operand.hbm [shape: bf16[256,256], index: 5, kind: input, shape index: {}]
  %s6 = inlined_call_operand.hbm [shape: f32[1,2304], index: 6, kind: input, shape index: {}]
  %s7 = inlined_call_operand.vmem [shape: f32[8,128], index: 7, kind: output, shape index: {}]
  %s8 = sld [smem:[#allocation0]]
  $region66: #{actor_critic_forward.1} parent=0
    _
  %s10 = ssub.s32 1, %s8
  %s11 = scalar_select 0, %s10, %s8
  $region1: #{actor_critic_forward.1} parent=0
    #allocation2 [shape = 'u8[4096]{0}', space=vmem, size = 0x1000, scoped, tag = 'input window, operand 0, single buffered']
    #allocation3 [shape = 's32[1]{0}', space=sflag, size = 0x4, scoped, tag = 'scoped memory for actor_critic_forward.1']
    #allocation4 [shape = 'u8[32768]{0}', space=vmem, size = 0x8000, scoped, tag = 'input window, operand 1, single buffered']
    #allocation5 [shape = 's32[1]{0}', space=sflag, size = 0x4, scoped, tag = 'scoped memory for actor_critic_forward.1']
    #allocation6 [shape = 'u8[524288]{0}', space=vmem, size = 0x80000, scoped, tag = 'input window, operand 2, single buffered']
    #allocation7 [shape = 'u8[262144]{0}', space=vmem, size = 0x40000, scoped, tag = 'input window, operand 3, single buffered']
    #allocation8 [shape = 's32[1]{0}', space=sflag, size = 0x4, scoped, tag = 'scoped memory for actor_critic_forward.1']
    #allocation9 [shape = 'u8[131072]{0}', space=vmem, size = 0x20000, scoped, tag = 'input window, operand 4, single buffered']
    #allocation10 [shape = 'u8[131072]{0}', space=vmem, size = 0x20000, scoped, tag = 'input window, operand 5, single buffered']
    #allocation11 [shape = 's32[1]{0}', space=sflag, size = 0x4, scoped, tag = 'scoped memory for actor_critic_forward.1']
    #allocation12 [shape = 'u8[9216]{0}', space=vmem, size = 0x2400, scoped, tag = 'input window, operand 6, single buffered']
    %12 = vsyncpa [#allocation3], 0
    %13 = vsyncpa [#allocation5], 0
    %14 = vsyncpa [#allocation8], 0
    %15 = vsyncpa [#allocation11], 0
    // Predicated region
    $region2: #{actor_critic_forward.1} parent=1 // pred_check
      _
    $region3: #{actor_critic_forward.1} parent=1 // pred_check_branch
      %17 = sbr.rel (0) target = $region5
    $region4: #{actor_critic_forward.1} parent=1 // pred_region
      %s19 = ssub.s32 128, 128
      %20 = vsyncadd [#allocation3], %s19
      %s22 = sshll.u32 [#allocation2], 4
      %s23 = int_to_ptr.vmem [resolvable:$true] %s22
      %25 = dma.hbm_to_vmem [thread:$0]  %s0, 128, %s23, [#allocation3]
    $region5: #{actor_critic_forward.1} parent=1 // pred_fallthru
      _
    // Predicated region
    $region6: #{actor_critic_forward.1} parent=1 // pred_check
      _
    $region7: #{actor_critic_forward.1} parent=1 // pred_check_branch
      %27 = sbr.rel (0) target = $region9
    $region8: #{actor_critic_forward.1} parent=1 // pred_region
      %s29 = ssub.s32 1024, 1024
      %30 = vsyncadd [#allocation5], %s29
      %s31 = sshll.u32 [#allocation4], 4
      %s32 = int_to_ptr.vmem [resolvable:$true] %s31
      %37 = dma.hbm_to_vmem [thread:$0]  %s1, 1024, %s32, [#allocation5], 512, 512, 32
    $region9: #{actor_critic_forward.1} parent=1 // pred_fallthru
      _
    // Predicated region
    $region10: #{actor_critic_forward.1} parent=1 // pred_check
      _
    $region11: #{actor_critic_forward.1} parent=1 // pred_check_branch
      %39 = sbr.rel (0) target = $region13
    $region12: #{actor_critic_forward.1} parent=1 // pred_region
      %s41 = ssub.s32 16384, 16384
      %42 = vsyncadd [#allocation5], %s41
      %s43 = sshll.u32 [#allocation6], 4
      %s44 = int_to_ptr.vmem [resolvable:$true] %s43
      %49 = dma.hbm_to_vmem [thread:$0]  %s2, 16384, %s44, [#allocation5], 256, 256, 16
    $region13: #{actor_critic_forward.1} parent=1 // pred_fallthru
      _
    // Predicated region
    $region14: #{actor_critic_forward.1} parent=1 // pred_check
      _
    $region15: #{actor_critic_forward.1} parent=1 // pred_check_branch
      %51 = sbr.rel (0) target = $region17
    $region16: #{actor_critic_forward.1} parent=1 // pred_region
      %s53 = ssub.s32 8192, 8192
      %54 = vsyncadd [#allocation8], %s53
      %s55 = sshll.u32 [#allocation7], 4
      %s56 = int_to_ptr.vmem [resolvable:$true] %s55
      %61 = dma.hbm_to_vmem [thread:$0]  %s3, 8192, %s56, [#allocation8], 128, 128, 8
    $region17: #{actor_critic_forward.1} parent=1 // pred_fallthru
      _
    // Predicated region
    $region18: #{actor_critic_forward.1} parent=1 // pred_check
      _
    $region19: #{actor_critic_forward.1} parent=1 // pred_check_branch
      %63 = sbr.rel (0) target = $region21
    $region20: #{actor_critic_forward.1} parent=1 // pred_region
      %s65 = ssub.s32 4096, 4096
      %66 = vsyncadd [#allocation8], %s65
      %s67 = sshll.u32 [#allocation9], 4
      %s68 = int_to_ptr.vmem [resolvable:$true] %s67
      %73 = dma.hbm_to_vmem [thread:$0]  %s4, 4096, %s68, [#allocation8], 128, 128, 8
    $region21: #{actor_critic_forward.1} parent=1 // pred_fallthru
      _
    // Predicated region
    $region22: #{actor_critic_forward.1} parent=1 // pred_check
      _
    $region23: #{actor_critic_forward.1} parent=1 // pred_check_branch
      %75 = sbr.rel (0) target = $region25
    $region24: #{actor_critic_forward.1} parent=1 // pred_region
      %s77 = ssub.s32 4096, 4096
      %78 = vsyncadd [#allocation11], %s77
      %s79 = sshll.u32 [#allocation10], 4
      %s80 = int_to_ptr.vmem [resolvable:$true] %s79
      %85 = dma.hbm_to_vmem [thread:$0]  %s5, 4096, %s80, [#allocation11], 128, 128, 8
    $region25: #{actor_critic_forward.1} parent=1 // pred_fallthru
      _
    // Predicated region
    $region26: #{actor_critic_forward.1} parent=1 // pred_check
      _
    $region27: #{actor_critic_forward.1} parent=1 // pred_check_branch
      %87 = sbr.rel (0) target = $region29
    $region28: #{actor_critic_forward.1} parent=1 // pred_region
      %s89 = ssub.s32 288, 288
      %90 = vsyncadd [#allocation11], %s89
      %s92 = sshll.u32 [#allocation12], 4
      %s93 = int_to_ptr.vmem [resolvable:$true] %s92
      %95 = dma.hbm_to_vmem [thread:$0]  %s6, 288, %s93, [#allocation11]
    $region29: #{actor_critic_forward.1} parent=1 // pred_fallthru
      _
    // Predicated region
    $region30: #{actor_critic_forward.1} parent=1 // pred_check
      _
    $region31: #{actor_critic_forward.1} parent=1 // pred_check_branch
      %97 = sbr.rel (0) target = $region33
    $region32: #{actor_critic_forward.1} parent=1 // pred_region
      %98 = dma.done [#allocation3], 128
    $region33: #{actor_critic_forward.1} parent=1 // pred_fallthru
      _
    // Predicated region
    $region34: #{actor_critic_forward.1} parent=1 // pred_check
      _
    $region35: #{actor_critic_forward.1} parent=1 // pred_check_branch
      %100 = sbr.rel (0) target = $region37
    $region36: #{actor_critic_forward.1} parent=1 // pred_region
      %101 = dma.done [#allocation5], 1024
    $region37: #{actor_critic_forward.1} parent=1 // pred_fallthru
      _
    // Predicated region
    $region38: #{actor_critic_forward.1} parent=1 // pred_check
      _
    $region39: #{actor_critic_forward.1} parent=1 // pred_check_branch
      %103 = sbr.rel (0) target = $region41
    $region40: #{actor_critic_forward.1} parent=1 // pred_region
      %104 = dma.done [#allocation5], 16384
    $region41: #{actor_critic_forward.1} parent=1 // pred_fallthru
      _
    // Predicated region
    $region42: #{actor_critic_forward.1} parent=1 // pred_check
      _
    $region43: #{actor_critic_forward.1} parent=1 // pred_check_branch
      %106 = sbr.rel (0) target = $region45
    $region44: #{actor_critic_forward.1} parent=1 // pred_region
      %107 = dma.done [#allocation8], 8192
    $region45: #{actor_critic_forward.1} parent=1 // pred_fallthru
      _
    // Predicated region
    $region46: #{actor_critic_forward.1} parent=1 // pred_check
      _
    $region47: #{actor_critic_forward.1} parent=1 // pred_check_branch
      %109 = sbr.rel (0) target = $region49
    $region48: #{actor_critic_forward.1} parent=1 // pred_region
      %110 = dma.done [#allocation8], 4096
    $region49: #{actor_critic_forward.1} parent=1 // pred_fallthru
      _
    // Predicated region
    $region50: #{actor_critic_forward.1} parent=1 // pred_check
      _
    $region51: #{actor_critic_forward.1} parent=1 // pred_check_branch
      %112 = sbr.rel (0) target = $region53
    $region52: #{actor_critic_forward.1} parent=1 // pred_region
      %113 = dma.done [#allocation11], 4096
    $region53: #{actor_critic_forward.1} parent=1 // pred_fallthru
      _
    // Predicated region
    $region54: #{actor_critic_forward.1} parent=1 // pred_check
      _
    $region55: #{actor_critic_forward.1} parent=1 // pred_check_branch
      %115 = sbr.rel (0) target = $region57
    $region56: #{actor_critic_forward.1} parent=1 // pred_region
      %116 = dma.done [#allocation11], 288
    $region57: #{actor_critic_forward.1} parent=1 // pred_fallthru
      _
    %v118 = vld [vmem:[#allocation2] sm:$0xff]
    %v119 = vpack.c.bf16 %v118, %v118
    %v120 = vld [vmem:[#allocation4] sm:$0xff]
    %v121 = vld [vmem:[#allocation4 + $0x8] sm:$0xff]
    %v122 = vld [vmem:[#allocation4 + $0x10] sm:$0xff]
    %v123 = vld [vmem:[#allocation4 + $0x18] sm:$0xff]
    %v124 = vld [vmem:[#allocation4 + $0x20] sm:$0xff]
    %v125 = vld [vmem:[#allocation4 + $0x28] sm:$0xff]
    %v126 = vld [vmem:[#allocation4 + $0x30] sm:$0xff]
    %v127 = vld [vmem:[#allocation4 + $0x38] sm:$0xff]
    %v128 = vld [vmem:[#allocation12] sm:$0xff]
    %v130 = vlaneseq
    %v131 = vshrl.u32 %v130, 7
    %v132 = vsub.s32 0, %v131
    %v133 = vrot.slane %v128, %v132
    %v134 = vlaneseq
    %v135 = vshrl.u32 %v134, 7
    %v136 = vsub.s32 1, %v135
    %v137 = vrot.slane %v128, %v136
    %v138 = vlaneseq
    %v139 = vshrl.u32 %v138, 7
    %v140 = vsub.s32 2, %v139
    %v141 = vrot.slane %v128, %v140
    %v142 = vlaneseq
    %v143 = vshrl.u32 %v142, 7
    %v144 = vsub.s32 3, %v143
    %v145 = vrot.slane %v128, %v144
    %v146 = vlaneseq
    %v147 = vshrl.u32 %v146, 7
    %v148 = vsub.s32 4, %v147
    %v149 = vrot.slane %v128, %v148
    %v150 = vlaneseq
    %v151 = vshrl.u32 %v150, 7
    %v152 = vsub.s32 5, %v151
    %v153 = vrot.slane %v128, %v152
    %v154 = vlaneseq
    %v155 = vshrl.u32 %v154, 7
    %v156 = vsub.s32 6, %v155
    %v157 = vrot.slane %v128, %v156
    %v158 = vlaneseq
    %v159 = vshrl.u32 %v158, 7
    %v160 = vsub.s32 7, %v159
    %v161 = vrot.slane %v128, %v160
    %v178 = vunpack.c.l.b16 %v120
    %v179 = vunpack.c.h.b16 %v120
    %v180 = vunpack.c.l.b16 %v121
    %v181 = vunpack.c.h.b16 %v121
    %v182 = vunpack.c.l.b16 %v122
    %v183 = vunpack.c.h.b16 %v122
    %v184 = vunpack.c.l.b16 %v123
    %v185 = vunpack.c.h.b16 %v123
    %v186 = vunpack.c.l.b16 %v124
    %v187 = vunpack.c.h.b16 %v124
    %v188 = vunpack.c.l.b16 %v125
    %v189 = vunpack.c.h.b16 %v125
    %v190 = vunpack.c.l.b16 %v126
    %v191 = vunpack.c.h.b16 %v126
    %v192 = vunpack.c.l.b16 %v127
    %v193 = vunpack.c.h.b16 %v127
    %v194 = vpack.c.b16 %v186, %v178
    %v195 = vpack.c.b16 %v187, %v179
    %v196 = vpack.c.b16 %v188, %v180
    %v197 = vpack.c.b16 %v189, %v181
    %v198 = vpack.c.b16 %v190, %v182
    %v199 = vpack.c.b16 %v191, %v183
    %v200 = vpack.c.b16 %v192, %v184
    %v201 = vpack.c.b16 %v193, %v185
    %vm210 = vcmask 130048
    %v212 = vsel %vm210, %v119, 0
    %214 = vmatprep.subr.bf16.mxu0 %v195
    %215 = vmatpush1.bf16.msra.mxu0 %v194
    %216 = vmatprep.subr.bf16.mxu0 0
    %217 = vmatpush1.bf16.msra.mxu0 0
    %218 = vmatprep.subr.bf16.mxu0 0
    %219 = vmatpush1.bf16.msra.mxu0 0
    %220 = vmatprep.subr.bf16.mxu0 0
    %221 = vmatpush1.bf16.msra.mxu0 0
    %222 = vmatprep.subr.bf16.mxu0 0
    %223 = vmatpush1.bf16.msra.mxu0 0
    %224 = vmatprep.subr.bf16.mxu0 0
    %225 = vmatpush1.bf16.msra.mxu0 0
    %226 = vmatprep.subr.bf16.mxu0 0
    %227 = vmatpush1.bf16.msra.mxu0 0
    %228 = vmatprep.subr.bf16.mxu0 0
    %229 = vmatpush1.bf16.msra.mxu0 0
    %230 = vmatprep.subr.bf16.mxu0 0
    %231 = vmatpush1.bf16.msra.mxu0 0
    %232 = vmatprep.subr.bf16.mxu0 0
    %233 = vmatpush1.bf16.msra.mxu0 0
    %234 = vmatprep.subr.bf16.mxu0 0
    %235 = vmatpush1.bf16.msra.mxu0 0
    %236 = vmatprep.subr.bf16.mxu0 0
    %237 = vmatpush1.bf16.msra.mxu0 0
    %238 = vmatprep.subr.bf16.mxu0 0
    %239 = vmatpush1.bf16.msra.mxu0 0
    %240 = vmatprep.subr.bf16.mxu0 0
    %241 = vmatpush1.bf16.msra.mxu0 0
    %242 = vmatprep.subr.bf16.mxu0 0
    %243 = vmatpush1.bf16.msra.mxu0 0
    %244 = vmatprep.subr.bf16.mxu0 0
    %245 = vmatpush1.bf16.msra.mxu0 0
    %246 = vmatprep.mubr.bf16.mxu0 0
    %247 = vmatmul.mubr.bf16.gmra.mrb[0].mxu0 %v212
    %v248 = vpop.f32.mrb[0].mxu0
    %v249 = vadd.f32 %v133, %v248
    %v250 = vpop.f32.mrb[0].mxu0
    %v251 = vadd.f32 %v137, %v250
    %v252 = vpop.f32.mrb[0].mxu0
    %v253 = vpop.f32.mrb[0].mxu0
    %254 = vdwg.mxu0
    %255 = vmatprep.subr.bf16.mxu0 %v197
    %256 = vmatpush1.bf16.msra.mxu0 %v196
    %257 = vmatprep.subr.bf16.mxu0 0
    %258 = vmatpush1.bf16.msra.mxu0 0
    %259 = vmatprep.subr.bf16.mxu0 0
    %260 = vmatpush1.bf16.msra.mxu0 0
    %261 = vmatprep.subr.bf16.mxu0 0
    %262 = vmatpush1.bf16.msra.mxu0 0
    %263 = vmatprep.subr.bf16.mxu0 0
    %264 = vmatpush1.bf16.msra.mxu0 0
    %265 = vmatprep.subr.bf16.mxu0 0
    %266 = vmatpush1.bf16.msra.mxu0 0
    %267 = vmatprep.subr.bf16.mxu0 0
    %268 = vmatpush1.bf16.msra.mxu0 0
    %269 = vmatprep.subr.bf16.mxu0 0
    %270 = vmatpush1.bf16.msra.mxu0 0
    %271 = vmatprep.subr.bf16.mxu0 0
    %272 = vmatpush1.bf16.msra.mxu0 0
    %273 = vmatprep.subr.bf16.mxu0 0
    %274 = vmatpush1.bf16.msra.mxu0 0
    %275 = vmatprep.subr.bf16.mxu0 0
    %276 = vmatpush1.bf16.msra.mxu0 0
    %277 = vmatprep.subr.bf16.mxu0 0
    %278 = vmatpush1.bf16.msra.mxu0 0
    %279 = vmatprep.subr.bf16.mxu0 0
    %280 = vmatpush1.bf16.msra.mxu0 0
    %281 = vmatprep.subr.bf16.mxu0 0
    %282 = vmatpush1.bf16.msra.mxu0 0
    %283 = vmatprep.subr.bf16.mxu0 0
    %284 = vmatpush1.bf16.msra.mxu0 0
    %285 = vmatprep.subr.bf16.mxu0 0
    %286 = vmatpush1.bf16.msra.mxu0 0
    %287 = vmatprep.mubr.bf16.mxu0 0
    %288 = vmatmul.mubr.bf16.gmra.mrb[0].mxu0 %v212
    %v289 = vpop.f32.mrb[0].mxu0
    %v290 = vadd.f32 %v141, %v289
    %v291 = vpop.f32.mrb[0].mxu0
    %v292 = vadd.f32 %v145, %v291
    %v293 = vpop.f32.mrb[0].mxu0
    %v294 = vpop.f32.mrb[0].mxu0
    %295 = vdwg.mxu0
    %296 = vmatprep.subr.bf16.mxu0 %v199
    %297 = vmatpush1.bf16.msra.mxu0 %v198
    %298 = vmatprep.subr.bf16.mxu0 0
    %299 = vmatpush1.bf16.msra.mxu0 0
    %300 = vmatprep.subr.bf16.mxu0 0
    %301 = vmatpush1.bf16.msra.mxu0 0
    %302 = vmatprep.subr.bf16.mxu0 0
    %303 = vmatpush1.bf16.msra.mxu0 0
    %304 = vmatprep.subr.bf16.mxu0 0
    %305 = vmatpush1.bf16.msra.mxu0 0
    %306 = vmatprep.subr.bf16.mxu0 0
    %307 = vmatpush1.bf16.msra.mxu0 0
    %308 = vmatprep.subr.bf16.mxu0 0
    %309 = vmatpush1.bf16.msra.mxu0 0
    %310 = vmatprep.subr.bf16.mxu0 0
    %311 = vmatpush1.bf16.msra.mxu0 0
    %312 = vmatprep.subr.bf16.mxu0 0
    %313 = vmatpush1.bf16.msra.mxu0 0
    %314 = vmatprep.subr.bf16.mxu0 0
    %315 = vmatpush1.bf16.msra.mxu0 0
    %316 = vmatprep.subr.bf16.mxu0 0
    %317 = vmatpush1.bf16.msra.mxu0 0
    %318 = vmatprep.subr.bf16.mxu0 0
    %319 = vmatpush1.bf16.msra.mxu0 0
    %320 = vmatprep.subr.bf16.mxu0 0
    %321 = vmatpush1.bf16.msra.mxu0 0
    %322 = vmatprep.subr.bf16.mxu0 0
    %323 = vmatpush1.bf16.msra.mxu0 0
    %324 = vmatprep.subr.bf16.mxu0 0
    %325 = vmatpush1.bf16.msra.mxu0 0
    %326 = vmatprep.subr.bf16.mxu0 0
    %327 = vmatpush1.bf16.msra.mxu0 0
    %328 = vmatprep.mubr.bf16.mxu0 0
    %329 = vmatmul.mubr.bf16.gmra.mrb[0].mxu0 %v212
    %v330 = vpop.f32.mrb[0].mxu0
    %v331 = vadd.f32 %v149, %v330
    %v332 = vpop.f32.mrb[0].mxu0
    %v333 = vadd.f32 %v153, %v332
    %v334 = vpop.f32.mrb[0].mxu0
    %v335 = vpop.f32.mrb[0].mxu0
    %336 = vdwg.mxu0
    %337 = vmatprep.subr.bf16.mxu0 %v201
    %338 = vmatpush1.bf16.msra.mxu0 %v200
    %339 = vmatprep.subr.bf16.mxu0 0
    %340 = vmatpush1.bf16.msra.mxu0 0
    %341 = vmatprep.subr.bf16.mxu0 0
    %342 = vmatpush1.bf16.msra.mxu0 0
    %343 = vmatprep.subr.bf16.mxu0 0
    %344 = vmatpush1.bf16.msra.mxu0 0
    %345 = vmatprep.subr.bf16.mxu0 0
    %346 = vmatpush1.bf16.msra.mxu0 0
    %347 = vmatprep.subr.bf16.mxu0 0
    %348 = vmatpush1.bf16.msra.mxu0 0
    %349 = vmatprep.subr.bf16.mxu0 0
    %350 = vmatpush1.bf16.msra.mxu0 0
    %351 = vmatprep.subr.bf16.mxu0 0
    %352 = vmatpush1.bf16.msra.mxu0 0
    %353 = vmatprep.subr.bf16.mxu0 0
    %354 = vmatpush1.bf16.msra.mxu0 0
    %355 = vmatprep.subr.bf16.mxu0 0
    %356 = vmatpush1.bf16.msra.mxu0 0
    %357 = vmatprep.subr.bf16.mxu0 0
    %358 = vmatpush1.bf16.msra.mxu0 0
    %359 = vmatprep.subr.bf16.mxu0 0
    %360 = vmatpush1.bf16.msra.mxu0 0
    %361 = vmatprep.subr.bf16.mxu0 0
    %362 = vmatpush1.bf16.msra.mxu0 0
    %363 = vmatprep.subr.bf16.mxu0 0
    %364 = vmatpush1.bf16.msra.mxu0 0
    %365 = vmatprep.subr.bf16.mxu0 0
    %366 = vmatpush1.bf16.msra.mxu0 0
    %367 = vmatprep.subr.bf16.mxu0 0
    %368 = vmatpush1.bf16.msra.mxu0 0
    %369 = vmatprep.mubr.bf16.mxu0 0
    %370 = vmatmul.mubr.bf16.gmra.mrb[0].mxu0 %v212
    %v371 = vpop.f32.mrb[0].mxu0
    %v372 = vadd.f32 %v157, %v371
    %v373 = vpop.f32.mrb[0].mxu0
    %v374 = vadd.f32 %v161, %v373
    %v375 = vpop.f32.mrb[0].mxu0
    %v376 = vpop.f32.mrb[0].mxu0
    %377 = vdwg.mxu0
    %v378 = vtanh.pop %v249
    %v379 = vtanh.pop %v251
    %v380 = vtanh.pop %v290
    %v381 = vtanh.pop %v292
    %v382 = vtanh.pop %v331
    %v383 = vtanh.pop %v333
    %v384 = vtanh.pop %v372
    %v385 = vtanh.pop %v374
    %v386 = vpack.c.bf16 %v378, %v378
    %v387 = vpack.c.bf16 %v379, %v379
    %v388 = vpack.c.bf16 %v380, %v380
    %v389 = vpack.c.bf16 %v381, %v381
    %v390 = vpack.c.bf16 %v382, %v382
    %v391 = vpack.c.bf16 %v383, %v383
    %v392 = vpack.c.bf16 %v384, %v384
    %v393 = vpack.c.bf16 %v385, %v385
    %v394 = vld [vmem:[#allocation6] sm:$0xff]
    %v395 = vld [vmem:[#allocation6 + $0x10] sm:$0xff]
    %v396 = vld [vmem:[#allocation6 + $0x20] sm:$0xff]
    %v397 = vld [vmem:[#allocation6 + $0x30] sm:$0xff]
    %v398 = vld [vmem:[#allocation6 + $0x40] sm:$0xff]
    %v399 = vld [vmem:[#allocation6 + $0x50] sm:$0xff]
    %v400 = vld [vmem:[#allocation6 + $0x60] sm:$0xff]
    %v401 = vld [vmem:[#allocation6 + $0x70] sm:$0xff]
    %v402 = vld [vmem:[#allocation6 + $0x80] sm:$0xff]
    %v403 = vld [vmem:[#allocation6 + $0x90] sm:$0xff]
    %v404 = vld [vmem:[#allocation6 + $0xa0] sm:$0xff]
    %v405 = vld [vmem:[#allocation6 + $0xb0] sm:$0xff]
    %v406 = vld [vmem:[#allocation6 + $0xc0] sm:$0xff]
    %v407 = vld [vmem:[#allocation6 + $0xd0] sm:$0xff]
    %v408 = vld [vmem:[#allocation6 + $0xe0] sm:$0xff]
    %v409 = vld [vmem:[#allocation6 + $0xf0] sm:$0xff]
    %v410 = vld [vmem:[#allocation6 + $0x100] sm:$0xff]
    %v411 = vld [vmem:[#allocation6 + $0x110] sm:$0xff]
    %v412 = vld [vmem:[#allocation6 + $0x120] sm:$0xff]
    %v413 = vld [vmem:[#allocation6 + $0x130] sm:$0xff]
    %v414 = vld [vmem:[#allocation6 + $0x140] sm:$0xff]
    %v415 = vld [vmem:[#allocation6 + $0x150] sm:$0xff]
    %v416 = vld [vmem:[#allocation6 + $0x160] sm:$0xff]
    %v417 = vld [vmem:[#allocation6 + $0x170] sm:$0xff]
    %v418 = vld [vmem:[#allocation6 + $0x180] sm:$0xff]
    %v419 = vld [vmem:[#allocation6 + $0x190] sm:$0xff]
    %v420 = vld [vmem:[#allocation6 + $0x1a0] sm:$0xff]
    %v421 = vld [vmem:[#allocation6 + $0x1b0] sm:$0xff]
    %v422 = vld [vmem:[#allocation6 + $0x1c0] sm:$0xff]
    %v423 = vld [vmem:[#allocation6 + $0x1d0] sm:$0xff]
    %v424 = vld [vmem:[#allocation6 + $0x1e0] sm:$0xff]
    %v425 = vld [vmem:[#allocation6 + $0x1f0] sm:$0xff]
    %v426 = vld [vmem:[#allocation6 + $0x200] sm:$0xff]
    %v427 = vld [vmem:[#allocation6 + $0x210] sm:$0xff]
    %v428 = vld [vmem:[#allocation6 + $0x220] sm:$0xff]
    %v429 = vld [vmem:[#allocation6 + $0x230] sm:$0xff]
    %v430 = vld [vmem:[#allocation6 + $0x240] sm:$0xff]
    %v431 = vld [vmem:[#allocation6 + $0x250] sm:$0xff]
    %v432 = vld [vmem:[#allocation6 + $0x260] sm:$0xff]
    %v433 = vld [vmem:[#allocation6 + $0x270] sm:$0xff]
    %v434 = vld [vmem:[#allocation6 + $0x280] sm:$0xff]
    %v435 = vld [vmem:[#allocation6 + $0x290] sm:$0xff]
    %v436 = vld [vmem:[#allocation6 + $0x2a0] sm:$0xff]
    %v437 = vld [vmem:[#allocation6 + $0x2b0] sm:$0xff]
    %v438 = vld [vmem:[#allocation6 + $0x2c0] sm:$0xff]
    %v439 = vld [vmem:[#allocation6 + $0x2d0] sm:$0xff]
    %v440 = vld [vmem:[#allocation6 + $0x2e0] sm:$0xff]
    %v441 = vld [vmem:[#allocation6 + $0x2f0] sm:$0xff]
    %v442 = vld [vmem:[#allocation6 + $0x300] sm:$0xff]
    %v443 = vld [vmem:[#allocation6 + $0x310] sm:$0xff]
    %v444 = vld [vmem:[#allocation6 + $0x320] sm:$0xff]
    %v445 = vld [vmem:[#allocation6 + $0x330] sm:$0xff]
    %v446 = vld [vmem:[#allocation6 + $0x340] sm:$0xff]
    %v447 = vld [vmem:[#allocation6 + $0x350] sm:$0xff]
    %v448 = vld [vmem:[#allocation6 + $0x360] sm:$0xff]
    %v449 = vld [vmem:[#allocation6 + $0x370] sm:$0xff]
    %v450 = vld [vmem:[#allocation6 + $0x380] sm:$0xff]
    %v451 = vld [vmem:[#allocation6 + $0x390] sm:$0xff]
    %v452 = vld [vmem:[#allocation6 + $0x3a0] sm:$0xff]
    %v453 = vld [vmem:[#allocation6 + $0x3b0] sm:$0xff]
    %v454 = vld [vmem:[#allocation6 + $0x3c0] sm:$0xff]
    %v455 = vld [vmem:[#allocation6 + $0x3d0] sm:$0xff]
    %v456 = vld [vmem:[#allocation6 + $0x3e0] sm:$0xff]
    %v457 = vld [vmem:[#allocation6 + $0x3f0] sm:$0xff]
    %v458 = vld [vmem:[#allocation12 + $0x8] sm:$0x3]
    %v460 = vlaneseq
    %v461 = vshrl.u32 %v460, 7
    %v462 = vsub.s32 0, %v461
    %v463 = vrot.slane %v458, %v462
    %v464 = vlaneseq
    %v465 = vshrl.u32 %v464, 7
    %v466 = vsub.s32 1, %v465
    %v467 = vrot.slane %v458, %v466
    %v534 = vunpack.c.l.b16 %v394
    %v535 = vunpack.c.h.b16 %v394
    %v536 = vunpack.c.l.b16 %v395
    %v537 = vunpack.c.h.b16 %v395
    %v538 = vunpack.c.l.b16 %v396
    %v539 = vunpack.c.h.b16 %v396
    %v540 = vunpack.c.l.b16 %v397
    %v541 = vunpack.c.h.b16 %v397
    %v542 = vunpack.c.l.b16 %v398
    %v543 = vunpack.c.h.b16 %v398
    %v544 = vunpack.c.l.b16 %v399
    %v545 = vunpack.c.h.b16 %v399
    %v546 = vunpack.c.l.b16 %v400
    %v547 = vunpack.c.h.b16 %v400
    %v548 = vunpack.c.l.b16 %v401
    %v549 = vunpack.c.h.b16 %v401
    %v550 = vunpack.c.l.b16 %v402
    %v551 = vunpack.c.h.b16 %v402
    %v552 = vunpack.c.l.b16 %v403
    %v553 = vunpack.c.h.b16 %v403
    %v554 = vunpack.c.l.b16 %v404
    %v555 = vunpack.c.h.b16 %v404
    %v556 = vunpack.c.l.b16 %v405
    %v557 = vunpack.c.h.b16 %v405
    %v558 = vunpack.c.l.b16 %v406
    %v559 = vunpack.c.h.b16 %v406
    %v560 = vunpack.c.l.b16 %v407
    %v561 = vunpack.c.h.b16 %v407
    %v562 = vunpack.c.l.b16 %v408
    %v563 = vunpack.c.h.b16 %v408
    %v564 = vunpack.c.l.b16 %v409
    %v565 = vunpack.c.h.b16 %v409
    %v566 = vunpack.c.l.b16 %v410
    %v567 = vunpack.c.h.b16 %v410
    %v568 = vunpack.c.l.b16 %v411
    %v569 = vunpack.c.h.b16 %v411
    %v570 = vunpack.c.l.b16 %v412
    %v571 = vunpack.c.h.b16 %v412
    %v572 = vunpack.c.l.b16 %v413
    %v573 = vunpack.c.h.b16 %v413
    %v574 = vunpack.c.l.b16 %v414
    %v575 = vunpack.c.h.b16 %v414
    %v576 = vunpack.c.l.b16 %v415
    %v577 = vunpack.c.h.b16 %v415
    %v578 = vunpack.c.l.b16 %v416
    %v579 = vunpack.c.h.b16 %v416
    %v580 = vunpack.c.l.b16 %v417
    %v581 = vunpack.c.h.b16 %v417
    %v582 = vunpack.c.l.b16 %v418
    %v583 = vunpack.c.h.b16 %v418
    %v584 = vunpack.c.l.b16 %v419
    %v585 = vunpack.c.h.b16 %v419
    %v586 = vunpack.c.l.b16 %v420
    %v587 = vunpack.c.h.b16 %v420
    %v588 = vunpack.c.l.b16 %v421
    %v589 = vunpack.c.h.b16 %v421
    %v590 = vunpack.c.l.b16 %v422
    %v591 = vunpack.c.h.b16 %v422
    %v592 = vunpack.c.l.b16 %v423
    %v593 = vunpack.c.h.b16 %v423
    %v594 = vunpack.c.l.b16 %v424
    %v595 = vunpack.c.h.b16 %v424
    %v596 = vunpack.c.l.b16 %v425
    %v597 = vunpack.c.h.b16 %v425
    %v598 = vunpack.c.l.b16 %v426
    %v599 = vunpack.c.h.b16 %v426
    %v600 = vunpack.c.l.b16 %v427
    %v601 = vunpack.c.h.b16 %v427
    %v602 = vunpack.c.l.b16 %v428
    %v603 = vunpack.c.h.b16 %v428
    %v604 = vunpack.c.l.b16 %v429
    %v605 = vunpack.c.h.b16 %v429
    %v606 = vunpack.c.l.b16 %v430
    %v607 = vunpack.c.h.b16 %v430
    %v608 = vunpack.c.l.b16 %v431
    %v609 = vunpack.c.h.b16 %v431
    %v610 = vunpack.c.l.b16 %v432
    %v611 = vunpack.c.h.b16 %v432
    %v612 = vunpack.c.l.b16 %v433
    %v613 = vunpack.c.h.b16 %v433
    %v614 = vunpack.c.l.b16 %v434
    %v615 = vunpack.c.h.b16 %v434
    %v616 = vunpack.c.l.b16 %v435
    %v617 = vunpack.c.h.b16 %v435
    %v618 = vunpack.c.l.b16 %v436
    %v619 = vunpack.c.h.b16 %v436
    %v620 = vunpack.c.l.b16 %v437
    %v621 = vunpack.c.h.b16 %v437
    %v622 = vunpack.c.l.b16 %v438
    %v623 = vunpack.c.h.b16 %v438
    %v624 = vunpack.c.l.b16 %v439
    %v625 = vunpack.c.h.b16 %v439
    %v626 = vunpack.c.l.b16 %v440
    %v627 = vunpack.c.h.b16 %v440
    %v628 = vunpack.c.l.b16 %v441
    %v629 = vunpack.c.h.b16 %v441
    %v630 = vunpack.c.l.b16 %v442
    %v631 = vunpack.c.h.b16 %v442
    %v632 = vunpack.c.l.b16 %v443
    %v633 = vunpack.c.h.b16 %v443
    %v634 = vunpack.c.l.b16 %v444
    %v635 = vunpack.c.h.b16 %v444
    %v636 = vunpack.c.l.b16 %v445
    %v637 = vunpack.c.h.b16 %v445
    %v638 = vunpack.c.l.b16 %v446
    %v639 = vunpack.c.h.b16 %v446
    %v640 = vunpack.c.l.b16 %v447
    %v641 = vunpack.c.h.b16 %v447
    %v642 = vunpack.c.l.b16 %v448
    %v643 = vunpack.c.h.b16 %v448
    %v644 = vunpack.c.l.b16 %v449
    %v645 = vunpack.c.h.b16 %v449
    %v646 = vunpack.c.l.b16 %v450
    %v647 = vunpack.c.h.b16 %v450
    %v648 = vunpack.c.l.b16 %v451
    %v649 = vunpack.c.h.b16 %v451
    %v650 = vunpack.c.l.b16 %v452
    %v651 = vunpack.c.h.b16 %v452
    %v652 = vunpack.c.l.b16 %v453
    %v653 = vunpack.c.h.b16 %v453
    %v654 = vunpack.c.l.b16 %v454
    %v655 = vunpack.c.h.b16 %v454
    %v656 = vunpack.c.l.b16 %v455
    %v657 = vunpack.c.h.b16 %v455
    %v658 = vunpack.c.l.b16 %v456
    %v659 = vunpack.c.h.b16 %v456
    %v660 = vunpack.c.l.b16 %v457
    %v661 = vunpack.c.h.b16 %v457
    %v662 = vpack.c.b16 %v536, %v534
    %v663 = vpack.c.b16 %v537, %v535
    %v664 = vpack.c.b16 %v540, %v538
    %v665 = vpack.c.b16 %v541, %v539
    %v666 = vpack.c.b16 %v544, %v542
    %v667 = vpack.c.b16 %v545, %v543
    %v668 = vpack.c.b16 %v548, %v546
    %v669 = vpack.c.b16 %v549, %v547
    %v670 = vpack.c.b16 %v552, %v550
    %v671 = vpack.c.b16 %v553, %v551
    %v672 = vpack.c.b16 %v556, %v554
    %v673 = vpack.c.b16 %v557, %v555
    %v674 = vpack.c.b16 %v560, %v558
    %v675 = vpack.c.b16 %v561, %v559
    %v676 = vpack.c.b16 %v564, %v562
    %v677 = vpack.c.b16 %v565, %v563
    %v678 = vpack.c.b16 %v568, %v566
    %v679 = vpack.c.b16 %v569, %v567
    %v680 = vpack.c.b16 %v572, %v570
    %v681 = vpack.c.b16 %v573, %v571
    %v682 = vpack.c.b16 %v576, %v574
    %v683 = vpack.c.b16 %v577, %v575
    %v684 = vpack.c.b16 %v580, %v578
    %v685 = vpack.c.b16 %v581, %v579
    %v686 = vpack.c.b16 %v584, %v582
    %v687 = vpack.c.b16 %v585, %v583
    %v688 = vpack.c.b16 %v588, %v586
    %v689 = vpack.c.b16 %v589, %v587
    %v690 = vpack.c.b16 %v592, %v590
    %v691 = vpack.c.b16 %v593, %v591
    %v692 = vpack.c.b16 %v596, %v594
    %v693 = vpack.c.b16 %v597, %v595
    %v694 = vpack.c.b16 %v600, %v598
    %v695 = vpack.c.b16 %v601, %v599
    %v696 = vpack.c.b16 %v604, %v602
    %v697 = vpack.c.b16 %v605, %v603
    %v698 = vpack.c.b16 %v608, %v606
    %v699 = vpack.c.b16 %v609, %v607
    %v700 = vpack.c.b16 %v612, %v610
    %v701 = vpack.c.b16 %v613, %v611
    %v702 = vpack.c.b16 %v616, %v614
    %v703 = vpack.c.b16 %v617, %v615
    %v704 = vpack.c.b16 %v620, %v618
    %v705 = vpack.c.b16 %v621, %v619
    %v706 = vpack.c.b16 %v624, %v622
    %v707 = vpack.c.b16 %v625, %v623
    %v708 = vpack.c.b16 %v628, %v626
    %v709 = vpack.c.b16 %v629, %v627
    %v710 = vpack.c.b16 %v632, %v630
    %v711 = vpack.c.b16 %v633, %v631
    %v712 = vpack.c.b16 %v636, %v634
    %v713 = vpack.c.b16 %v637, %v635
    %v714 = vpack.c.b16 %v640, %v638
    %v715 = vpack.c.b16 %v641, %v639
    %v716 = vpack.c.b16 %v644, %v642
    %v717 = vpack.c.b16 %v645, %v643
    %v718 = vpack.c.b16 %v648, %v646
    %v719 = vpack.c.b16 %v649, %v647
    %v720 = vpack.c.b16 %v652, %v650
    %v721 = vpack.c.b16 %v653, %v651
    %v722 = vpack.c.b16 %v656, %v654
    %v723 = vpack.c.b16 %v657, %v655
    %v724 = vpack.c.b16 %v660, %v658
    %v725 = vpack.c.b16 %v661, %v659
    %790 = vmatprep.subr.bf16.mxu0 %v663
    %791 = vmatpush1.bf16.msra.mxu0 %v662
    %792 = vmatprep.subr.bf16.mxu0 %v665
    %793 = vmatpush1.bf16.msra.mxu0 %v664
    %794 = vmatprep.subr.bf16.mxu0 %v667
    %795 = vmatpush1.bf16.msra.mxu0 %v666
    %796 = vmatprep.subr.bf16.mxu0 %v669
    %797 = vmatpush1.bf16.msra.mxu0 %v668
    %798 = vmatprep.subr.bf16.mxu0 %v671
    %799 = vmatpush1.bf16.msra.mxu0 %v670
    %800 = vmatprep.subr.bf16.mxu0 %v673
    %801 = vmatpush1.bf16.msra.mxu0 %v672
    %802 = vmatprep.subr.bf16.mxu0 %v675
    %803 = vmatpush1.bf16.msra.mxu0 %v674
    %804 = vmatprep.subr.bf16.mxu0 %v677
    %805 = vmatpush1.bf16.msra.mxu0 %v676
    %806 = vmatprep.subr.bf16.mxu0 %v679
    %807 = vmatpush1.bf16.msra.mxu0 %v678
    %808 = vmatprep.subr.bf16.mxu0 %v681
    %809 = vmatpush1.bf16.msra.mxu0 %v680
    %810 = vmatprep.subr.bf16.mxu0 %v683
    %811 = vmatpush1.bf16.msra.mxu0 %v682
    %812 = vmatprep.subr.bf16.mxu0 %v685
    %813 = vmatpush1.bf16.msra.mxu0 %v684
    %814 = vmatprep.subr.bf16.mxu0 %v687
    %815 = vmatpush1.bf16.msra.mxu0 %v686
    %816 = vmatprep.subr.bf16.mxu0 %v689
    %817 = vmatpush1.bf16.msra.mxu0 %v688
    %818 = vmatprep.subr.bf16.mxu0 %v691
    %819 = vmatpush1.bf16.msra.mxu0 %v690
    %820 = vmatprep.subr.bf16.mxu0 %v693
    %821 = vmatpush1.bf16.msra.mxu0 %v692
    %822 = vmatprep.mubr.bf16.mxu0 %v387
    %823 = vmatmul.mubr.bf16.gmra.mrb[0].mxu0 %v386
    %v824 = vpop.f32.mrb[0].mxu0
    %v825 = vadd.f32 %v463, %v824
    %v826 = vpop.f32.mrb[0].mxu0
    %v827 = vadd.f32 %v467, %v826
    %v828 = vpop.f32.mrb[0].mxu0
    %v829 = vpop.f32.mrb[0].mxu0
    %830 = vdwg.mxu0
    %831 = vmatprep.subr.bf16.mxu0 %v695
    %832 = vmatpush1.bf16.msra.mxu0 %v694
    %833 = vmatprep.subr.bf16.mxu0 %v697
    %834 = vmatpush1.bf16.msra.mxu0 %v696
    %835 = vmatprep.subr.bf16.mxu0 %v699
    %836 = vmatpush1.bf16.msra.mxu0 %v698
    %837 = vmatprep.subr.bf16.mxu0 %v701
    %838 = vmatpush1.bf16.msra.mxu0 %v700
    %839 = vmatprep.subr.bf16.mxu0 %v703
    %840 = vmatpush1.bf16.msra.mxu0 %v702
    %841 = vmatprep.subr.bf16.mxu0 %v705
    %842 = vmatpush1.bf16.msra.mxu0 %v704
    %843 = vmatprep.subr.bf16.mxu0 %v707
    %844 = vmatpush1.bf16.msra.mxu0 %v706
    %845 = vmatprep.subr.bf16.mxu0 %v709
    %846 = vmatpush1.bf16.msra.mxu0 %v708
    %847 = vmatprep.subr.bf16.mxu0 %v711
    %848 = vmatpush1.bf16.msra.mxu0 %v710
    %849 = vmatprep.subr.bf16.mxu0 %v713
    %850 = vmatpush1.bf16.msra.mxu0 %v712
    %851 = vmatprep.subr.bf16.mxu0 %v715
    %852 = vmatpush1.bf16.msra.mxu0 %v714
    %853 = vmatprep.subr.bf16.mxu0 %v717
    %854 = vmatpush1.bf16.msra.mxu0 %v716
    %855 = vmatprep.subr.bf16.mxu0 %v719
    %856 = vmatpush1.bf16.msra.mxu0 %v718
    %857 = vmatprep.subr.bf16.mxu0 %v721
    %858 = vmatpush1.bf16.msra.mxu0 %v720
    %859 = vmatprep.subr.bf16.mxu0 %v723
    %860 = vmatpush1.bf16.msra.mxu0 %v722
    %861 = vmatprep.subr.bf16.mxu0 %v725
    %862 = vmatpush1.bf16.msra.mxu0 %v724
    %863 = vmatprep.mubr.bf16.mxu0 %v389
    %864 = vmatmul.mubr.bf16.gmra.mrb[0].mxu0 %v388
    %v865 = vpop.f32.mrb[0].mxu0
    %v866 = vadd.f32 %v825, %v865
    %v867 = vpop.f32.mrb[0].mxu0
    %v868 = vadd.f32 %v827, %v867
    %v869 = vpop.f32.mrb[0].mxu0
    %v870 = vpop.f32.mrb[0].mxu0
    %871 = vdwg.mxu0
    %v872 = vtanh.pop %v866
    %v873 = vtanh.pop %v868
    %v874 = vpack.c.bf16 %v872, %v872
    %v875 = vpack.c.bf16 %v873, %v873
    %v876 = vld [vmem:[#allocation6 + $0x8] sm:$0xff]
    %v877 = vld [vmem:[#allocation6 + $0x18] sm:$0xff]
    %v878 = vld [vmem:[#allocation6 + $0x28] sm:$0xff]
    %v879 = vld [vmem:[#allocation6 + $0x38] sm:$0xff]
    %v880 = vld [vmem:[#allocation6 + $0x48] sm:$0xff]
    %v881 = vld [vmem:[#allocation6 + $0x58] sm:$0xff]
    %v882 = vld [vmem:[#allocation6 + $0x68] sm:$0xff]
    %v883 = vld [vmem:[#allocation6 + $0x78] sm:$0xff]
    %v884 = vld [vmem:[#allocation6 + $0x88] sm:$0xff]
    %v885 = vld [vmem:[#allocation6 + $0x98] sm:$0xff]
    %v886 = vld [vmem:[#allocation6 + $0xa8] sm:$0xff]
    %v887 = vld [vmem:[#allocation6 + $0xb8] sm:$0xff]
    %v888 = vld [vmem:[#allocation6 + $0xc8] sm:$0xff]
    %v889 = vld [vmem:[#allocation6 + $0xd8] sm:$0xff]
    %v890 = vld [vmem:[#allocation6 + $0xe8] sm:$0xff]
    %v891 = vld [vmem:[#allocation6 + $0xf8] sm:$0xff]
    %v892 = vld [vmem:[#allocation6 + $0x108] sm:$0xff]
    %v893 = vld [vmem:[#allocation6 + $0x118] sm:$0xff]
    %v894 = vld [vmem:[#allocation6 + $0x128] sm:$0xff]
    %v895 = vld [vmem:[#allocation6 + $0x138] sm:$0xff]
    %v896 = vld [vmem:[#allocation6 + $0x148] sm:$0xff]
    %v897 = vld [vmem:[#allocation6 + $0x158] sm:$0xff]
    %v898 = vld [vmem:[#allocation6 + $0x168] sm:$0xff]
    %v899 = vld [vmem:[#allocation6 + $0x178] sm:$0xff]
    %v900 = vld [vmem:[#allocation6 + $0x188] sm:$0xff]
    %v901 = vld [vmem:[#allocation6 + $0x198] sm:$0xff]
    %v902 = vld [vmem:[#allocation6 + $0x1a8] sm:$0xff]
    %v903 = vld [vmem:[#allocation6 + $0x1b8] sm:$0xff]
    %v904 = vld [vmem:[#allocation6 + $0x1c8] sm:$0xff]
    %v905 = vld [vmem:[#allocation6 + $0x1d8] sm:$0xff]
    %v906 = vld [vmem:[#allocation6 + $0x1e8] sm:$0xff]
    %v907 = vld [vmem:[#allocation6 + $0x1f8] sm:$0xff]
    %v908 = vld [vmem:[#allocation6 + $0x208] sm:$0xff]
    %v909 = vld [vmem:[#allocation6 + $0x218] sm:$0xff]
    %v910 = vld [vmem:[#allocation6 + $0x228] sm:$0xff]
    %v911 = vld [vmem:[#allocation6 + $0x238] sm:$0xff]
    %v912 = vld [vmem:[#allocation6 + $0x248] sm:$0xff]
    %v913 = vld [vmem:[#allocation6 + $0x258] sm:$0xff]
    %v914 = vld [vmem:[#allocation6 + $0x268] sm:$0xff]
    %v915 = vld [vmem:[#allocation6 + $0x278] sm:$0xff]
    %v916 = vld [vmem:[#allocation6 + $0x288] sm:$0xff]
    %v917 = vld [vmem:[#allocation6 + $0x298] sm:$0xff]
    %v918 = vld [vmem:[#allocation6 + $0x2a8] sm:$0xff]
    %v919 = vld [vmem:[#allocation6 + $0x2b8] sm:$0xff]
    %v920 = vld [vmem:[#allocation6 + $0x2c8] sm:$0xff]
    %v921 = vld [vmem:[#allocation6 + $0x2d8] sm:$0xff]
    %v922 = vld [vmem:[#allocation6 + $0x2e8] sm:$0xff]
    %v923 = vld [vmem:[#allocation6 + $0x2f8] sm:$0xff]
    %v924 = vld [vmem:[#allocation6 + $0x308] sm:$0xff]
    %v925 = vld [vmem:[#allocation6 + $0x318] sm:$0xff]
    %v926 = vld [vmem:[#allocation6 + $0x328] sm:$0xff]
    %v927 = vld [vmem:[#allocation6 + $0x338] sm:$0xff]
    %v928 = vld [vmem:[#allocation6 + $0x348] sm:$0xff]
    %v929 = vld [vmem:[#allocation6 + $0x358] sm:$0xff]
    %v930 = vld [vmem:[#allocation6 + $0x368] sm:$0xff]
    %v931 = vld [vmem:[#allocation6 + $0x378] sm:$0xff]
    %v932 = vld [vmem:[#allocation6 + $0x388] sm:$0xff]
    %v933 = vld [vmem:[#allocation6 + $0x398] sm:$0xff]
    %v934 = vld [vmem:[#allocation6 + $0x3a8] sm:$0xff]
    %v935 = vld [vmem:[#allocation6 + $0x3b8] sm:$0xff]
    %v936 = vld [vmem:[#allocation6 + $0x3c8] sm:$0xff]
    %v937 = vld [vmem:[#allocation6 + $0x3d8] sm:$0xff]
    %v938 = vld [vmem:[#allocation6 + $0x3e8] sm:$0xff]
    %v939 = vld [vmem:[#allocation6 + $0x3f8] sm:$0xff]
    %v940 = vld [vmem:[#allocation12 + $0xa] sm:$0x3]
    %v942 = vlaneseq
    %v943 = vshrl.u32 %v942, 7
    %v944 = vsub.s32 0, %v943
    %v945 = vrot.slane %v940, %v944
    %v946 = vlaneseq
    %v947 = vshrl.u32 %v946, 7
    %v948 = vsub.s32 1, %v947
    %v949 = vrot.slane %v940, %v948
    %v1016 = vunpack.c.l.b16 %v876
    %v1017 = vunpack.c.h.b16 %v876
    %v1018 = vunpack.c.l.b16 %v877
    %v1019 = vunpack.c.h.b16 %v877
    %v1020 = vunpack.c.l.b16 %v878
    %v1021 = vunpack.c.h.b16 %v878
    %v1022 = vunpack.c.l.b16 %v879
    %v1023 = vunpack.c.h.b16 %v879
    %v1024 = vunpack.c.l.b16 %v880
    %v1025 = vunpack.c.h.b16 %v880
    %v1026 = vunpack.c.l.b16 %v881
    %v1027 = vunpack.c.h.b16 %v881
    %v1028 = vunpack.c.l.b16 %v882
    %v1029 = vunpack.c.h.b16 %v882
    %v1030 = vunpack.c.l.b16 %v883
    %v1031 = vunpack.c.h.b16 %v883
    %v1032 = vunpack.c.l.b16 %v884
    %v1033 = vunpack.c.h.b16 %v884
    %v1034 = vunpack.c.l.b16 %v885
    %v1035 = vunpack.c.h.b16 %v885
    %v1036 = vunpack.c.l.b16 %v886
    %v1037 = vunpack.c.h.b16 %v886
    %v1038 = vunpack.c.l.b16 %v887
    %v1039 = vunpack.c.h.b16 %v887
    %v1040 = vunpack.c.l.b16 %v888
    %v1041 = vunpack.c.h.b16 %v888
    %v1042 = vunpack.c.l.b16 %v889
    %v1043 = vunpack.c.h.b16 %v889
    %v1044 = vunpack.c.l.b16 %v890
    %v1045 = vunpack.c.h.b16 %v890
    %v1046 = vunpack.c.l.b16 %v891
    %v1047 = vunpack.c.h.b16 %v891
    %v1048 = vunpack.c.l.b16 %v892
    %v1049 = vunpack.c.h.b16 %v892
    %v1050 = vunpack.c.l.b16 %v893
    %v1051 = vunpack.c.h.b16 %v893
    %v1052 = vunpack.c.l.b16 %v894
    %v1053 = vunpack.c.h.b16 %v894
    %v1054 = vunpack.c.l.b16 %v895
    %v1055 = vunpack.c.h.b16 %v895
    %v1056 = vunpack.c.l.b16 %v896
    %v1057 = vunpack.c.h.b16 %v896
    %v1058 = vunpack.c.l.b16 %v897
    %v1059 = vunpack.c.h.b16 %v897
    %v1060 = vunpack.c.l.b16 %v898
    %v1061 = vunpack.c.h.b16 %v898
    %v1062 = vunpack.c.l.b16 %v899
    %v1063 = vunpack.c.h.b16 %v899
    %v1064 = vunpack.c.l.b16 %v900
    %v1065 = vunpack.c.h.b16 %v900
    %v1066 = vunpack.c.l.b16 %v901
    %v1067 = vunpack.c.h.b16 %v901
    %v1068 = vunpack.c.l.b16 %v902
    %v1069 = vunpack.c.h.b16 %v902
    %v1070 = vunpack.c.l.b16 %v903
    %v1071 = vunpack.c.h.b16 %v903
    %v1072 = vunpack.c.l.b16 %v904
    %v1073 = vunpack.c.h.b16 %v904
    %v1074 = vunpack.c.l.b16 %v905
    %v1075 = vunpack.c.h.b16 %v905
    %v1076 = vunpack.c.l.b16 %v906
    %v1077 = vunpack.c.h.b16 %v906
    %v1078 = vunpack.c.l.b16 %v907
    %v1079 = vunpack.c.h.b16 %v907
    %v1080 = vunpack.c.l.b16 %v908
    %v1081 = vunpack.c.h.b16 %v908
    %v1082 = vunpack.c.l.b16 %v909
    %v1083 = vunpack.c.h.b16 %v909
    %v1084 = vunpack.c.l.b16 %v910
    %v1085 = vunpack.c.h.b16 %v910
    %v1086 = vunpack.c.l.b16 %v911
    %v1087 = vunpack.c.h.b16 %v911
    %v1088 = vunpack.c.l.b16 %v912
    %v1089 = vunpack.c.h.b16 %v912
    %v1090 = vunpack.c.l.b16 %v913
    %v1091 = vunpack.c.h.b16 %v913
    %v1092 = vunpack.c.l.b16 %v914
    %v1093 = vunpack.c.h.b16 %v914
    %v1094 = vunpack.c.l.b16 %v915
    %v1095 = vunpack.c.h.b16 %v915
    %v1096 = vunpack.c.l.b16 %v916
    %v1097 = vunpack.c.h.b16 %v916
    %v1098 = vunpack.c.l.b16 %v917
    %v1099 = vunpack.c.h.b16 %v917
    %v1100 = vunpack.c.l.b16 %v918
    %v1101 = vunpack.c.h.b16 %v918
    %v1102 = vunpack.c.l.b16 %v919
    %v1103 = vunpack.c.h.b16 %v919
    %v1104 = vunpack.c.l.b16 %v920
    %v1105 = vunpack.c.h.b16 %v920
    %v1106 = vunpack.c.l.b16 %v921
    %v1107 = vunpack.c.h.b16 %v921
    %v1108 = vunpack.c.l.b16 %v922
    %v1109 = vunpack.c.h.b16 %v922
    %v1110 = vunpack.c.l.b16 %v923
    %v1111 = vunpack.c.h.b16 %v923
    %v1112 = vunpack.c.l.b16 %v924
    %v1113 = vunpack.c.h.b16 %v924
    %v1114 = vunpack.c.l.b16 %v925
    %v1115 = vunpack.c.h.b16 %v925
    %v1116 = vunpack.c.l.b16 %v926
    %v1117 = vunpack.c.h.b16 %v926
    %v1118 = vunpack.c.l.b16 %v927
    %v1119 = vunpack.c.h.b16 %v927
    %v1120 = vunpack.c.l.b16 %v928
    %v1121 = vunpack.c.h.b16 %v928
    %v1122 = vunpack.c.l.b16 %v929
    %v1123 = vunpack.c.h.b16 %v929
    %v1124 = vunpack.c.l.b16 %v930
    %v1125 = vunpack.c.h.b16 %v930
    %v1126 = vunpack.c.l.b16 %v931
    %v1127 = vunpack.c.h.b16 %v931
    %v1128 = vunpack.c.l.b16 %v932
    %v1129 = vunpack.c.h.b16 %v932
    %v1130 = vunpack.c.l.b16 %v933
    %v1131 = vunpack.c.h.b16 %v933
    %v1132 = vunpack.c.l.b16 %v934
    %v1133 = vunpack.c.h.b16 %v934
    %v1134 = vunpack.c.l.b16 %v935
    %v1135 = vunpack.c.h.b16 %v935
    %v1136 = vunpack.c.l.b16 %v936
    %v1137 = vunpack.c.h.b16 %v936
    %v1138 = vunpack.c.l.b16 %v937
    %v1139 = vunpack.c.h.b16 %v937
    %v1140 = vunpack.c.l.b16 %v938
    %v1141 = vunpack.c.h.b16 %v938
    %v1142 = vunpack.c.l.b16 %v939
    %v1143 = vunpack.c.h.b16 %v939
    %v1144 = vpack.c.b16 %v1018, %v1016
    %v1145 = vpack.c.b16 %v1019, %v1017
    %v1146 = vpack.c.b16 %v1022, %v1020
    %v1147 = vpack.c.b16 %v1023, %v1021
    %v1148 = vpack.c.b16 %v1026, %v1024
    %v1149 = vpack.c.b16 %v1027, %v1025
    %v1150 = vpack.c.b16 %v1030, %v1028
    %v1151 = vpack.c.b16 %v1031, %v1029
    %v1152 = vpack.c.b16 %v1034, %v1032
    %v1153 = vpack.c.b16 %v1035, %v1033
    %v1154 = vpack.c.b16 %v1038, %v1036
    %v1155 = vpack.c.b16 %v1039, %v1037
    %v1156 = vpack.c.b16 %v1042, %v1040
    %v1157 = vpack.c.b16 %v1043, %v1041
    %v1158 = vpack.c.b16 %v1046, %v1044
    %v1159 = vpack.c.b16 %v1047, %v1045
    %v1160 = vpack.c.b16 %v1050, %v1048
    %v1161 = vpack.c.b16 %v1051, %v1049
    %v1162 = vpack.c.b16 %v1054, %v1052
    %v1163 = vpack.c.b16 %v1055, %v1053
    %v1164 = vpack.c.b16 %v1058, %v1056
    %v1165 = vpack.c.b16 %v1059, %v1057
    %v1166 = vpack.c.b16 %v1062, %v1060
    %v1167 = vpack.c.b16 %v1063, %v1061
    %v1168 = vpack.c.b16 %v1066, %v1064
    %v1169 = vpack.c.b16 %v1067, %v1065
    %v1170 = vpack.c.b16 %v1070, %v1068
    %v1171 = vpack.c.b16 %v1071, %v1069
    %v1172 = vpack.c.b16 %v1074, %v1072
    %v1173 = vpack.c.b16 %v1075, %v1073
    %v1174 = vpack.c.b16 %v1078, %v1076
    %v1175 = vpack.c.b16 %v1079, %v1077
    %v1176 = vpack.c.b16 %v1082, %v1080
    %v1177 = vpack.c.b16 %v1083, %v1081
    %v1178 = vpack.c.b16 %v1086, %v1084
    %v1179 = vpack.c.b16 %v1087, %v1085
    %v1180 = vpack.c.b16 %v1090, %v1088
    %v1181 = vpack.c.b16 %v1091, %v1089
    %v1182 = vpack.c.b16 %v1094, %v1092
    %v1183 = vpack.c.b16 %v1095, %v1093
    %v1184 = vpack.c.b16 %v1098, %v1096
    %v1185 = vpack.c.b16 %v1099, %v1097
    %v1186 = vpack.c.b16 %v1102, %v1100
    %v1187 = vpack.c.b16 %v1103, %v1101
    %v1188 = vpack.c.b16 %v1106, %v1104
    %v1189 = vpack.c.b16 %v1107, %v1105
    %v1190 = vpack.c.b16 %v1110, %v1108
    %v1191 = vpack.c.b16 %v1111, %v1109
    %v1192 = vpack.c.b16 %v1114, %v1112
    %v1193 = vpack.c.b16 %v1115, %v1113
    %v1194 = vpack.c.b16 %v1118, %v1116
    %v1195 = vpack.c.b16 %v1119, %v1117
    %v1196 = vpack.c.b16 %v1122, %v1120
    %v1197 = vpack.c.b16 %v1123, %v1121
    %v1198 = vpack.c.b16 %v1126, %v1124
    %v1199 = vpack.c.b16 %v1127, %v1125
    %v1200 = vpack.c.b16 %v1130, %v1128
    %v1201 = vpack.c.b16 %v1131, %v1129
    %v1202 = vpack.c.b16 %v1134, %v1132
    %v1203 = vpack.c.b16 %v1135, %v1133
    %v1204 = vpack.c.b16 %v1138, %v1136
    %v1205 = vpack.c.b16 %v1139, %v1137
    %v1206 = vpack.c.b16 %v1142, %v1140
    %v1207 = vpack.c.b16 %v1143, %v1141
    %1272 = vmatprep.subr.bf16.mxu0 %v1145
    %1273 = vmatpush1.bf16.msra.mxu0 %v1144
    %1274 = vmatprep.subr.bf16.mxu0 %v1147
    %1275 = vmatpush1.bf16.msra.mxu0 %v1146
    %1276 = vmatprep.subr.bf16.mxu0 %v1149
    %1277 = vmatpush1.bf16.msra.mxu0 %v1148
    %1278 = vmatprep.subr.bf16.mxu0 %v1151
    %1279 = vmatpush1.bf16.msra.mxu0 %v1150
    %1280 = vmatprep.subr.bf16.mxu0 %v1153
    %1281 = vmatpush1.bf16.msra.mxu0 %v1152
    %1282 = vmatprep.subr.bf16.mxu0 %v1155
    %1283 = vmatpush1.bf16.msra.mxu0 %v1154
    %1284 = vmatprep.subr.bf16.mxu0 %v1157
    %1285 = vmatpush1.bf16.msra.mxu0 %v1156
    %1286 = vmatprep.subr.bf16.mxu0 %v1159
    %1287 = vmatpush1.bf16.msra.mxu0 %v1158
    %1288 = vmatprep.subr.bf16.mxu0 %v1161
    %1289 = vmatpush1.bf16.msra.mxu0 %v1160
    %1290 = vmatprep.subr.bf16.mxu0 %v1163
    %1291 = vmatpush1.bf16.msra.mxu0 %v1162
    %1292 = vmatprep.subr.bf16.mxu0 %v1165
    %1293 = vmatpush1.bf16.msra.mxu0 %v1164
    %1294 = vmatprep.subr.bf16.mxu0 %v1167
    %1295 = vmatpush1.bf16.msra.mxu0 %v1166
    %1296 = vmatprep.subr.bf16.mxu0 %v1169
    %1297 = vmatpush1.bf16.msra.mxu0 %v1168
    %1298 = vmatprep.subr.bf16.mxu0 %v1171
    %1299 = vmatpush1.bf16.msra.mxu0 %v1170
    %1300 = vmatprep.subr.bf16.mxu0 %v1173
    %1301 = vmatpush1.bf16.msra.mxu0 %v1172
    %1302 = vmatprep.subr.bf16.mxu0 %v1175
    %1303 = vmatpush1.bf16.msra.mxu0 %v1174
    %1304 = vmatprep.mubr.bf16.mxu0 %v391
    %1305 = vmatmul.mubr.bf16.gmra.mrb[0].mxu0 %v390
    %v1306 = vpop.f32.mrb[0].mxu0
    %v1307 = vadd.f32 %v945, %v1306
    %v1308 = vpop.f32.mrb[0].mxu0
    %v1309 = vadd.f32 %v949, %v1308
    %v1310 = vpop.f32.mrb[0].mxu0
    %v1311 = vpop.f32.mrb[0].mxu0
    %1312 = vdwg.mxu0
    %1313 = vmatprep.subr.bf16.mxu0 %v1177
    %1314 = vmatpush1.bf16.msra.mxu0 %v1176
    %1315 = vmatprep.subr.bf16.mxu0 %v1179
    %1316 = vmatpush1.bf16.msra.mxu0 %v1178
    %1317 = vmatprep.subr.bf16.mxu0 %v1181
    %1318 = vmatpush1.bf16.msra.mxu0 %v1180
    %1319 = vmatprep.subr.bf16.mxu0 %v1183
    %1320 = vmatpush1.bf16.msra.mxu0 %v1182
    %1321 = vmatprep.subr.bf16.mxu0 %v1185
    %1322 = vmatpush1.bf16.msra.mxu0 %v1184
    %1323 = vmatprep.subr.bf16.mxu0 %v1187
    %1324 = vmatpush1.bf16.msra.mxu0 %v1186
    %1325 = vmatprep.subr.bf16.mxu0 %v1189
    %1326 = vmatpush1.bf16.msra.mxu0 %v1188
    %1327 = vmatprep.subr.bf16.mxu0 %v1191
    %1328 = vmatpush1.bf16.msra.mxu0 %v1190
    %1329 = vmatprep.subr.bf16.mxu0 %v1193
    %1330 = vmatpush1.bf16.msra.mxu0 %v1192
    %1331 = vmatprep.subr.bf16.mxu0 %v1195
    %1332 = vmatpush1.bf16.msra.mxu0 %v1194
    %1333 = vmatprep.subr.bf16.mxu0 %v1197
    %1334 = vmatpush1.bf16.msra.mxu0 %v1196
    %1335 = vmatprep.subr.bf16.mxu0 %v1199
    %1336 = vmatpush1.bf16.msra.mxu0 %v1198
    %1337 = vmatprep.subr.bf16.mxu0 %v1201
    %1338 = vmatpush1.bf16.msra.mxu0 %v1200
    %1339 = vmatprep.subr.bf16.mxu0 %v1203
    %1340 = vmatpush1.bf16.msra.mxu0 %v1202
    %1341 = vmatprep.subr.bf16.mxu0 %v1205
    %1342 = vmatpush1.bf16.msra.mxu0 %v1204
    %1343 = vmatprep.subr.bf16.mxu0 %v1207
    %1344 = vmatpush1.bf16.msra.mxu0 %v1206
    %1345 = vmatprep.mubr.bf16.mxu0 %v393
    %1346 = vmatmul.mubr.bf16.gmra.mrb[0].mxu0 %v392
    %v1347 = vpop.f32.mrb[0].mxu0
    %v1348 = vadd.f32 %v1307, %v1347
    %v1349 = vpop.f32.mrb[0].mxu0
    %v1350 = vadd.f32 %v1309, %v1349
    %v1351 = vpop.f32.mrb[0].mxu0
    %v1352 = vpop.f32.mrb[0].mxu0
    %1353 = vdwg.mxu0
    %v1354 = vtanh.pop %v1348
    %v1355 = vtanh.pop %v1350
    %v1356 = vpack.c.bf16 %v1354, %v1354
    %v1357 = vpack.c.bf16 %v1355, %v1355
    %v1358 = vld [vmem:[#allocation7] sm:$0xf]
    %v1359 = vld [vmem:[#allocation7 + $0x8] sm:$0xf]
    %v1360 = vld [vmem:[#allocation7 + $0x10] sm:$0xf]
    %v1361 = vld [vmem:[#allocation7 + $0x18] sm:$0xf]
    %v1362 = vld [vmem:[#allocation7 + $0x20] sm:$0xf]
    %v1363 = vld [vmem:[#allocation7 + $0x28] sm:$0xf]
    %v1364 = vld [vmem:[#allocation7 + $0x30] sm:$0xf]
    %v1365 = vld [vmem:[#allocation7 + $0x38] sm:$0xf]
    %v1366 = vld [vmem:[#allocation7 + $0x40] sm:$0xf]
    %v1367 = vld [vmem:[#allocation7 + $0x48] sm:$0xf]
    %v1368 = vld [vmem:[#allocation7 + $0x50] sm:$0xf]
    %v1369 = vld [vmem:[#allocation7 + $0x58] sm:$0xf]
    %v1370 = vld [vmem:[#allocation7 + $0x60] sm:$0xf]
    %v1371 = vld [vmem:[#allocation7 + $0x68] sm:$0xf]
    %v1372 = vld [vmem:[#allocation7 + $0x70] sm:$0xf]
    %v1373 = vld [vmem:[#allocation7 + $0x78] sm:$0xf]
    %v1374 = vld [vmem:[#allocation7 + $0x80] sm:$0xf]
    %v1375 = vld [vmem:[#allocation7 + $0x88] sm:$0xf]
    %v1376 = vld [vmem:[#allocation7 + $0x90] sm:$0xf]
    %v1377 = vld [vmem:[#allocation7 + $0x98] sm:$0xf]
    %v1378 = vld [vmem:[#allocation7 + $0xa0] sm:$0xf]
    %v1379 = vld [vmem:[#allocation7 + $0xa8] sm:$0xf]
    %v1380 = vld [vmem:[#allocation7 + $0xb0] sm:$0xf]
    %v1381 = vld [vmem:[#allocation7 + $0xb8] sm:$0xf]
    %v1382 = vld [vmem:[#allocation7 + $0xc0] sm:$0xf]
    %v1383 = vld [vmem:[#allocation7 + $0xc8] sm:$0xf]
    %v1384 = vld [vmem:[#allocation7 + $0xd0] sm:$0xf]
    %v1385 = vld [vmem:[#allocation7 + $0xd8] sm:$0xf]
    %v1386 = vld [vmem:[#allocation7 + $0xe0] sm:$0xf]
    %v1387 = vld [vmem:[#allocation7 + $0xe8] sm:$0xf]
    %v1388 = vld [vmem:[#allocation7 + $0xf0] sm:$0xf]
    %v1389 = vld [vmem:[#allocation7 + $0xf8] sm:$0xf]
    %v1390 = vld [vmem:[#allocation12 + $0xc] sm:$0x1]
    %v1392 = vlaneseq
    %v1393 = vshrl.u32 %v1392, 7
    %v1394 = vsub.s32 0, %v1393
    %v1395 = vrot.slane %v1390, %v1394
    %v1429 = vunpack.c.l.b16 %v1358
    %v1430 = vunpack.c.l.b16 %v1359
    %v1431 = vunpack.c.l.b16 %v1360
    %v1432 = vunpack.c.l.b16 %v1361
    %v1433 = vunpack.c.l.b16 %v1362
    %v1434 = vunpack.c.l.b16 %v1363
    %v1435 = vunpack.c.l.b16 %v1364
    %v1436 = vunpack.c.l.b16 %v1365
    %v1437 = vunpack.c.l.b16 %v1366
    %v1438 = vunpack.c.l.b16 %v1367
    %v1439 = vunpack.c.l.b16 %v1368
    %v1440 = vunpack.c.l.b16 %v1369
    %v1441 = vunpack.c.l.b16 %v1370
    %v1442 = vunpack.c.l.b16 %v1371
    %v1443 = vunpack.c.l.b16 %v1372
    %v1444 = vunpack.c.l.b16 %v1373
    %v1445 = vunpack.c.l.b16 %v1374
    %v1446 = vunpack.c.l.b16 %v1375
    %v1447 = vunpack.c.l.b16 %v1376
    %v1448 = vunpack.c.l.b16 %v1377
    %v1449 = vunpack.c.l.b16 %v1378
    %v1450 = vunpack.c.l.b16 %v1379
    %v1451 = vunpack.c.l.b16 %v1380
    %v1452 = vunpack.c.l.b16 %v1381
    %v1453 = vunpack.c.l.b16 %v1382
    %v1454 = vunpack.c.l.b16 %v1383
    %v1455 = vunpack.c.l.b16 %v1384
    %v1456 = vunpack.c.l.b16 %v1385
    %v1457 = vunpack.c.l.b16 %v1386
    %v1458 = vunpack.c.l.b16 %v1387
    %v1459 = vunpack.c.l.b16 %v1388
    %v1460 = vunpack.c.l.b16 %v1389
    %v1461 = vpack.c.b16 %v1430, %v1429
    %v1462 = vpack.c.b16 %v1432, %v1431
    %v1463 = vpack.c.b16 %v1434, %v1433
    %v1464 = vpack.c.b16 %v1436, %v1435
    %v1465 = vpack.c.b16 %v1438, %v1437
    %v1466 = vpack.c.b16 %v1440, %v1439
    %v1467 = vpack.c.b16 %v1442, %v1441
    %v1468 = vpack.c.b16 %v1444, %v1443
    %v1469 = vpack.c.b16 %v1446, %v1445
    %v1470 = vpack.c.b16 %v1448, %v1447
    %v1471 = vpack.c.b16 %v1450, %v1449
    %v1472 = vpack.c.b16 %v1452, %v1451
    %v1473 = vpack.c.b16 %v1454, %v1453
    %v1474 = vpack.c.b16 %v1456, %v1455
    %v1475 = vpack.c.b16 %v1458, %v1457
    %v1476 = vpack.c.b16 %v1460, %v1459
    %1493 = vmatprep.subr.bf16.mxu0 0
    %1494 = vmatpush1.bf16.msra.mxu0 %v1461
    %1495 = vmatprep.subr.bf16.mxu0 0
    %1496 = vmatpush1.bf16.msra.mxu0 %v1462
    %1497 = vmatprep.subr.bf16.mxu0 0
    %1498 = vmatpush1.bf16.msra.mxu0 %v1463
    %1499 = vmatprep.subr.bf16.mxu0 0
    %1500 = vmatpush1.bf16.msra.mxu0 %v1464
    %1501 = vmatprep.subr.bf16.mxu0 0
    %1502 = vmatpush1.bf16.msra.mxu0 %v1465
    %1503 = vmatprep.subr.bf16.mxu0 0
    %1504 = vmatpush1.bf16.msra.mxu0 %v1466
    %1505 = vmatprep.subr.bf16.mxu0 0
    %1506 = vmatpush1.bf16.msra.mxu0 %v1467
    %1507 = vmatprep.subr.bf16.mxu0 0
    %1508 = vmatpush1.bf16.msra.mxu0 %v1468
    %1509 = vmatprep.subr.bf16.mxu0 0
    %1510 = vmatpush1.bf16.msra.mxu0 %v1469
    %1511 = vmatprep.subr.bf16.mxu0 0
    %1512 = vmatpush1.bf16.msra.mxu0 %v1470
    %1513 = vmatprep.subr.bf16.mxu0 0
    %1514 = vmatpush1.bf16.msra.mxu0 %v1471
    %1515 = vmatprep.subr.bf16.mxu0 0
    %1516 = vmatpush1.bf16.msra.mxu0 %v1472
    %1517 = vmatprep.subr.bf16.mxu0 0
    %1518 = vmatpush1.bf16.msra.mxu0 %v1473
    %1519 = vmatprep.subr.bf16.mxu0 0
    %1520 = vmatpush1.bf16.msra.mxu0 %v1474
    %1521 = vmatprep.subr.bf16.mxu0 0
    %1522 = vmatpush1.bf16.msra.mxu0 %v1475
    %1523 = vmatprep.subr.bf16.mxu0 0
    %1524 = vmatpush1.bf16.msra.mxu0 %v1476
    %1525 = vmatprep.mubr.bf16.mxu0 %v875
    %1526 = vmatmul.mubr.bf16.gmra.mrb[0].mxu0 %v874
    %v1527 = vpop.f32.mrb[0].mxu0
    %v1528 = vadd.f32 %v1395, %v1527
    %v1529 = vpop.f32.mrb[0].mxu0
    %v1530 = vpop.f32.mrb[0].mxu0
    %v1531 = vpop.f32.mrb[0].mxu0
    %1532 = vdwg.mxu0
    %v1533 = vtanh.pop %v1528
    %v1534 = vpack.c.bf16 %v1533, %v1533
    %v1535 = vld [vmem:[#allocation7 + $0x104] sm:$0xf]
    %v1536 = vld [vmem:[#allocation7 + $0x10c] sm:$0xf]
    %v1537 = vld [vmem:[#allocation7 + $0x114] sm:$0xf]
    %v1538 = vld [vmem:[#allocation7 + $0x11c] sm:$0xf]
    %v1539 = vld [vmem:[#allocation7 + $0x124] sm:$0xf]
    %v1540 = vld [vmem:[#allocation7 + $0x12c] sm:$0xf]
    %v1541 = vld [vmem:[#allocation7 + $0x134] sm:$0xf]
    %v1542 = vld [vmem:[#allocation7 + $0x13c] sm:$0xf]
    %v1543 = vld [vmem:[#allocation7 + $0x144] sm:$0xf]
    %v1544 = vld [vmem:[#allocation7 + $0x14c] sm:$0xf]
    %v1545 = vld [vmem:[#allocation7 + $0x154] sm:$0xf]
    %v1546 = vld [vmem:[#allocation7 + $0x15c] sm:$0xf]
    %v1547 = vld [vmem:[#allocation7 + $0x164] sm:$0xf]
    %v1548 = vld [vmem:[#allocation7 + $0x16c] sm:$0xf]
    %v1549 = vld [vmem:[#allocation7 + $0x174] sm:$0xf]
    %v1550 = vld [vmem:[#allocation7 + $0x17c] sm:$0xf]
    %v1551 = vld [vmem:[#allocation7 + $0x184] sm:$0xf]
    %v1552 = vld [vmem:[#allocation7 + $0x18c] sm:$0xf]
    %v1553 = vld [vmem:[#allocation7 + $0x194] sm:$0xf]
    %v1554 = vld [vmem:[#allocation7 + $0x19c] sm:$0xf]
    %v1555 = vld [vmem:[#allocation7 + $0x1a4] sm:$0xf]
    %v1556 = vld [vmem:[#allocation7 + $0x1ac] sm:$0xf]
    %v1557 = vld [vmem:[#allocation7 + $0x1b4] sm:$0xf]
    %v1558 = vld [vmem:[#allocation7 + $0x1bc] sm:$0xf]
    %v1559 = vld [vmem:[#allocation7 + $0x1c4] sm:$0xf]
    %v1560 = vld [vmem:[#allocation7 + $0x1cc] sm:$0xf]
    %v1561 = vld [vmem:[#allocation7 + $0x1d4] sm:$0xf]
    %v1562 = vld [vmem:[#allocation7 + $0x1dc] sm:$0xf]
    %v1563 = vld [vmem:[#allocation7 + $0x1e4] sm:$0xf]
    %v1564 = vld [vmem:[#allocation7 + $0x1ec] sm:$0xf]
    %v1565 = vld [vmem:[#allocation7 + $0x1f4] sm:$0xf]
    %v1566 = vld [vmem:[#allocation7 + $0x1fc] sm:$0xf]
    %v1567 = vld [vmem:[#allocation12 + $0xd] sm:$0x1]
    %v1569 = vlaneseq
    %v1570 = vshrl.u32 %v1569, 7
    %v1571 = vsub.s32 0, %v1570
    %v1572 = vrot.slane %v1567, %v1571
    %v1606 = vunpack.c.l.b16 %v1535
    %v1607 = vunpack.c.l.b16 %v1536
    %v1608 = vunpack.c.l.b16 %v1537
    %v1609 = vunpack.c.l.b16 %v1538
    %v1610 = vunpack.c.l.b16 %v1539
    %v1611 = vunpack.c.l.b16 %v1540
    %v1612 = vunpack.c.l.b16 %v1541
    %v1613 = vunpack.c.l.b16 %v1542
    %v1614 = vunpack.c.l.b16 %v1543
    %v1615 = vunpack.c.l.b16 %v1544
    %v1616 = vunpack.c.l.b16 %v1545
    %v1617 = vunpack.c.l.b16 %v1546
    %v1618 = vunpack.c.l.b16 %v1547
    %v1619 = vunpack.c.l.b16 %v1548
    %v1620 = vunpack.c.l.b16 %v1549
    %v1621 = vunpack.c.l.b16 %v1550
    %v1622 = vunpack.c.l.b16 %v1551
    %v1623 = vunpack.c.l.b16 %v1552
    %v1624 = vunpack.c.l.b16 %v1553
    %v1625 = vunpack.c.l.b16 %v1554
    %v1626 = vunpack.c.l.b16 %v1555
    %v1627 = vunpack.c.l.b16 %v1556
    %v1628 = vunpack.c.l.b16 %v1557
    %v1629 = vunpack.c.l.b16 %v1558
    %v1630 = vunpack.c.l.b16 %v1559
    %v1631 = vunpack.c.l.b16 %v1560
    %v1632 = vunpack.c.l.b16 %v1561
    %v1633 = vunpack.c.l.b16 %v1562
    %v1634 = vunpack.c.l.b16 %v1563
    %v1635 = vunpack.c.l.b16 %v1564
    %v1636 = vunpack.c.l.b16 %v1565
    %v1637 = vunpack.c.l.b16 %v1566
    %v1638 = vpack.c.b16 %v1607, %v1606
    %v1639 = vpack.c.b16 %v1609, %v1608
    %v1640 = vpack.c.b16 %v1611, %v1610
    %v1641 = vpack.c.b16 %v1613, %v1612
    %v1642 = vpack.c.b16 %v1615, %v1614
    %v1643 = vpack.c.b16 %v1617, %v1616
    %v1644 = vpack.c.b16 %v1619, %v1618
    %v1645 = vpack.c.b16 %v1621, %v1620
    %v1646 = vpack.c.b16 %v1623, %v1622
    %v1647 = vpack.c.b16 %v1625, %v1624
    %v1648 = vpack.c.b16 %v1627, %v1626
    %v1649 = vpack.c.b16 %v1629, %v1628
    %v1650 = vpack.c.b16 %v1631, %v1630
    %v1651 = vpack.c.b16 %v1633, %v1632
    %v1652 = vpack.c.b16 %v1635, %v1634
    %v1653 = vpack.c.b16 %v1637, %v1636
    %1670 = vmatprep.subr.bf16.mxu0 0
    %1671 = vmatpush1.bf16.msra.mxu0 %v1638
    %1672 = vmatprep.subr.bf16.mxu0 0
    %1673 = vmatpush1.bf16.msra.mxu0 %v1639
    %1674 = vmatprep.subr.bf16.mxu0 0
    %1675 = vmatpush1.bf16.msra.mxu0 %v1640
    %1676 = vmatprep.subr.bf16.mxu0 0
    %1677 = vmatpush1.bf16.msra.mxu0 %v1641
    %1678 = vmatprep.subr.bf16.mxu0 0
    %1679 = vmatpush1.bf16.msra.mxu0 %v1642
    %1680 = vmatprep.subr.bf16.mxu0 0
    %1681 = vmatpush1.bf16.msra.mxu0 %v1643
    %1682 = vmatprep.subr.bf16.mxu0 0
    %1683 = vmatpush1.bf16.msra.mxu0 %v1644
    %1684 = vmatprep.subr.bf16.mxu0 0
    %1685 = vmatpush1.bf16.msra.mxu0 %v1645
    %1686 = vmatprep.subr.bf16.mxu0 0
    %1687 = vmatpush1.bf16.msra.mxu0 %v1646
    %1688 = vmatprep.subr.bf16.mxu0 0
    %1689 = vmatpush1.bf16.msra.mxu0 %v1647
    %1690 = vmatprep.subr.bf16.mxu0 0
    %1691 = vmatpush1.bf16.msra.mxu0 %v1648
    %1692 = vmatprep.subr.bf16.mxu0 0
    %1693 = vmatpush1.bf16.msra.mxu0 %v1649
    %1694 = vmatprep.subr.bf16.mxu0 0
    %1695 = vmatpush1.bf16.msra.mxu0 %v1650
    %1696 = vmatprep.subr.bf16.mxu0 0
    %1697 = vmatpush1.bf16.msra.mxu0 %v1651
    %1698 = vmatprep.subr.bf16.mxu0 0
    %1699 = vmatpush1.bf16.msra.mxu0 %v1652
    %1700 = vmatprep.subr.bf16.mxu0 0
    %1701 = vmatpush1.bf16.msra.mxu0 %v1653
    %1702 = vmatprep.mubr.bf16.mxu0 %v1357
    %1703 = vmatmul.mubr.bf16.gmra.mrb[0].mxu0 %v1356
    %v1704 = vpop.f32.mrb[0].mxu0
    %v1705 = vadd.f32 %v1572, %v1704
    %v1706 = vpop.f32.mrb[0].mxu0
    %v1707 = vpop.f32.mrb[0].mxu0
    %v1708 = vpop.f32.mrb[0].mxu0
    %1709 = vdwg.mxu0
    %v1710 = vtanh.pop %v1705
    %v1711 = vpack.c.bf16 %v1710, %v1710
    %v1712 = vld [vmem:[#allocation9] sm:$0xf]
    %v1713 = vld [vmem:[#allocation9 + $0x8] sm:$0xf]
    %v1714 = vld [vmem:[#allocation9 + $0x10] sm:$0xf]
    %v1715 = vld [vmem:[#allocation9 + $0x18] sm:$0xf]
    %v1716 = vld [vmem:[#allocation9 + $0x20] sm:$0xf]
    %v1717 = vld [vmem:[#allocation9 + $0x28] sm:$0xf]
    %v1718 = vld [vmem:[#allocation9 + $0x30] sm:$0xf]
    %v1719 = vld [vmem:[#allocation9 + $0x38] sm:$0xf]
    %v1720 = vld [vmem:[#allocation9 + $0x40] sm:$0xf]
    %v1721 = vld [vmem:[#allocation9 + $0x48] sm:$0xf]
    %v1722 = vld [vmem:[#allocation9 + $0x50] sm:$0xf]
    %v1723 = vld [vmem:[#allocation9 + $0x58] sm:$0xf]
    %v1724 = vld [vmem:[#allocation9 + $0x60] sm:$0xf]
    %v1725 = vld [vmem:[#allocation9 + $0x68] sm:$0xf]
    %v1726 = vld [vmem:[#allocation9 + $0x70] sm:$0xf]
    %v1727 = vld [vmem:[#allocation9 + $0x78] sm:$0xf]
    %v1728 = vld [vmem:[#allocation12 + $0xe] sm:$0x1]
    %v1730 = vlaneseq
    %v1731 = vshrl.u32 %v1730, 7
    %v1732 = vsub.s32 0, %v1731
    %v1733 = vrot.slane %v1728, %v1732
    %v1751 = vunpack.c.l.b16 %v1712
    %v1752 = vunpack.c.l.b16 %v1713
    %v1753 = vunpack.c.l.b16 %v1714
    %v1754 = vunpack.c.l.b16 %v1715
    %v1755 = vunpack.c.l.b16 %v1716
    %v1756 = vunpack.c.l.b16 %v1717
    %v1757 = vunpack.c.l.b16 %v1718
    %v1758 = vunpack.c.l.b16 %v1719
    %v1759 = vunpack.c.l.b16 %v1720
    %v1760 = vunpack.c.l.b16 %v1721
    %v1761 = vunpack.c.l.b16 %v1722
    %v1762 = vunpack.c.l.b16 %v1723
    %v1763 = vunpack.c.l.b16 %v1724
    %v1764 = vunpack.c.l.b16 %v1725
    %v1765 = vunpack.c.l.b16 %v1726
    %v1766 = vunpack.c.l.b16 %v1727
    %v1767 = vpack.c.b16 %v1752, %v1751
    %v1768 = vpack.c.b16 %v1754, %v1753
    %v1769 = vpack.c.b16 %v1756, %v1755
    %v1770 = vpack.c.b16 %v1758, %v1757
    %v1771 = vpack.c.b16 %v1760, %v1759
    %v1772 = vpack.c.b16 %v1762, %v1761
    %v1773 = vpack.c.b16 %v1764, %v1763
    %v1774 = vpack.c.b16 %v1766, %v1765
    %1783 = vmatprep.subr.bf16.mxu0 0
    %1784 = vmatpush1.bf16.msra.mxu0 %v1767
    %1785 = vmatprep.subr.bf16.mxu0 0
    %1786 = vmatpush1.bf16.msra.mxu0 %v1768
    %1787 = vmatprep.subr.bf16.mxu0 0
    %1788 = vmatpush1.bf16.msra.mxu0 %v1769
    %1789 = vmatprep.subr.bf16.mxu0 0
    %1790 = vmatpush1.bf16.msra.mxu0 %v1770
    %1791 = vmatprep.subr.bf16.mxu0 0
    %1792 = vmatpush1.bf16.msra.mxu0 %v1771
    %1793 = vmatprep.subr.bf16.mxu0 0
    %1794 = vmatpush1.bf16.msra.mxu0 %v1772
    %1795 = vmatprep.subr.bf16.mxu0 0
    %1796 = vmatpush1.bf16.msra.mxu0 %v1773
    %1797 = vmatprep.subr.bf16.mxu0 0
    %1798 = vmatpush1.bf16.msra.mxu0 %v1774
    %1799 = vmatprep.subr.bf16.mxu0 0
    %1800 = vmatpush1.bf16.msra.mxu0 0
    %1801 = vmatprep.subr.bf16.mxu0 0
    %1802 = vmatpush1.bf16.msra.mxu0 0
    %1803 = vmatprep.subr.bf16.mxu0 0
    %1804 = vmatpush1.bf16.msra.mxu0 0
    %1805 = vmatprep.subr.bf16.mxu0 0
    %1806 = vmatpush1.bf16.msra.mxu0 0
    %1807 = vmatprep.subr.bf16.mxu0 0
    %1808 = vmatpush1.bf16.msra.mxu0 0
    %1809 = vmatprep.subr.bf16.mxu0 0
    %1810 = vmatpush1.bf16.msra.mxu0 0
    %1811 = vmatprep.subr.bf16.mxu0 0
    %1812 = vmatpush1.bf16.msra.mxu0 0
    %1813 = vmatprep.subr.bf16.mxu0 0
    %1814 = vmatpush1.bf16.msra.mxu0 0
    %1815 = vmatprep.mubr.bf16.mxu0 0
    %1816 = vmatmul.mubr.bf16.gmra.mrb[0].mxu0 %v1534
    %v1817 = vpop.f32.mrb[0].mxu0
    %v1818 = vadd.f32 %v1733, %v1817
    %v1819 = vpop.f32.mrb[0].mxu0
    %v1820 = vpop.f32.mrb[0].mxu0
    %v1821 = vpop.f32.mrb[0].mxu0
    %1822 = vdwg.mxu0
    %v1823 = vtanh.pop %v1818
    %v1824 = vpack.c.bf16 %v1823, %v1823
    %v1825 = vld [vmem:[#allocation9 + $0x84] sm:$0xf]
    %v1826 = vld [vmem:[#allocation9 + $0x8c] sm:$0xf]
    %v1827 = vld [vmem:[#allocation9 + $0x94] sm:$0xf]
    %v1828 = vld [vmem:[#allocation9 + $0x9c] sm:$0xf]
    %v1829 = vld [vmem:[#allocation9 + $0xa4] sm:$0xf]
    %v1830 = vld [vmem:[#allocation9 + $0xac] sm:$0xf]
    %v1831 = vld [vmem:[#allocation9 + $0xb4] sm:$0xf]
    %v1832 = vld [vmem:[#allocation9 + $0xbc] sm:$0xf]
    %v1833 = vld [vmem:[#allocation9 + $0xc4] sm:$0xf]
    %v1834 = vld [vmem:[#allocation9 + $0xcc] sm:$0xf]
    %v1835 = vld [vmem:[#allocation9 + $0xd4] sm:$0xf]
    %v1836 = vld [vmem:[#allocation9 + $0xdc] sm:$0xf]
    %v1837 = vld [vmem:[#allocation9 + $0xe4] sm:$0xf]
    %v1838 = vld [vmem:[#allocation9 + $0xec] sm:$0xf]
    %v1839 = vld [vmem:[#allocation9 + $0xf4] sm:$0xf]
    %v1840 = vld [vmem:[#allocation9 + $0xfc] sm:$0xf]
    %v1841 = vld [vmem:[#allocation12 + $0xf] sm:$0x1]
    %v1843 = vlaneseq
    %v1844 = vshrl.u32 %v1843, 7
    %v1845 = vsub.s32 0, %v1844
    %v1846 = vrot.slane %v1841, %v1845
    %v1864 = vunpack.c.l.b16 %v1825
    %v1865 = vunpack.c.l.b16 %v1826
    %v1866 = vunpack.c.l.b16 %v1827
    %v1867 = vunpack.c.l.b16 %v1828
    %v1868 = vunpack.c.l.b16 %v1829
    %v1869 = vunpack.c.l.b16 %v1830
    %v1870 = vunpack.c.l.b16 %v1831
    %v1871 = vunpack.c.l.b16 %v1832
    %v1872 = vunpack.c.l.b16 %v1833
    %v1873 = vunpack.c.l.b16 %v1834
    %v1874 = vunpack.c.l.b16 %v1835
    %v1875 = vunpack.c.l.b16 %v1836
    %v1876 = vunpack.c.l.b16 %v1837
    %v1877 = vunpack.c.l.b16 %v1838
    %v1878 = vunpack.c.l.b16 %v1839
    %v1879 = vunpack.c.l.b16 %v1840
    %v1880 = vpack.c.b16 %v1865, %v1864
    %v1881 = vpack.c.b16 %v1867, %v1866
    %v1882 = vpack.c.b16 %v1869, %v1868
    %v1883 = vpack.c.b16 %v1871, %v1870
    %v1884 = vpack.c.b16 %v1873, %v1872
    %v1885 = vpack.c.b16 %v1875, %v1874
    %v1886 = vpack.c.b16 %v1877, %v1876
    %v1887 = vpack.c.b16 %v1879, %v1878
    %1896 = vmatprep.subr.bf16.mxu0 0
    %1897 = vmatpush1.bf16.msra.mxu0 %v1880
    %1898 = vmatprep.subr.bf16.mxu0 0
    %1899 = vmatpush1.bf16.msra.mxu0 %v1881
    %1900 = vmatprep.subr.bf16.mxu0 0
    %1901 = vmatpush1.bf16.msra.mxu0 %v1882
    %1902 = vmatprep.subr.bf16.mxu0 0
    %1903 = vmatpush1.bf16.msra.mxu0 %v1883
    %1904 = vmatprep.subr.bf16.mxu0 0
    %1905 = vmatpush1.bf16.msra.mxu0 %v1884
    %1906 = vmatprep.subr.bf16.mxu0 0
    %1907 = vmatpush1.bf16.msra.mxu0 %v1885
    %1908 = vmatprep.subr.bf16.mxu0 0
    %1909 = vmatpush1.bf16.msra.mxu0 %v1886
    %1910 = vmatprep.subr.bf16.mxu0 0
    %1911 = vmatpush1.bf16.msra.mxu0 %v1887
    %1912 = vmatprep.subr.bf16.mxu0 0
    %1913 = vmatpush1.bf16.msra.mxu0 0
    %1914 = vmatprep.subr.bf16.mxu0 0
    %1915 = vmatpush1.bf16.msra.mxu0 0
    %1916 = vmatprep.subr.bf16.mxu0 0
    %1917 = vmatpush1.bf16.msra.mxu0 0
    %1918 = vmatprep.subr.bf16.mxu0 0
    %1919 = vmatpush1.bf16.msra.mxu0 0
    %1920 = vmatprep.subr.bf16.mxu0 0
    %1921 = vmatpush1.bf16.msra.mxu0 0
    %1922 = vmatprep.subr.bf16.mxu0 0
    %1923 = vmatpush1.bf16.msra.mxu0 0
    %1924 = vmatprep.subr.bf16.mxu0 0
    %1925 = vmatpush1.bf16.msra.mxu0 0
    %1926 = vmatprep.subr.bf16.mxu0 0
    %1927 = vmatpush1.bf16.msra.mxu0 0
    %1928 = vmatprep.mubr.bf16.mxu0 0
    %1929 = vmatmul.mubr.bf16.gmra.mrb[0].mxu0 %v1711
    %v1930 = vpop.f32.mrb[0].mxu0
    %v1931 = vadd.f32 %v1846, %v1930
    %v1932 = vpop.f32.mrb[0].mxu0
    %v1933 = vpop.f32.mrb[0].mxu0
    %v1934 = vpop.f32.mrb[0].mxu0
    %1935 = vdwg.mxu0
    %v1936 = vtanh.pop %v1931
    %v1937 = vpack.c.bf16 %v1936, %v1936
    %v1938 = vld [vmem:[#allocation10] sm:$0xf]
    %v1939 = vld [vmem:[#allocation10 + $0x8] sm:$0xf]
    %v1940 = vld [vmem:[#allocation10 + $0x10] sm:$0xf]
    %v1941 = vld [vmem:[#allocation10 + $0x18] sm:$0xf]
    %v1942 = vld [vmem:[#allocation10 + $0x20] sm:$0xf]
    %v1943 = vld [vmem:[#allocation10 + $0x28] sm:$0xf]
    %v1944 = vld [vmem:[#allocation10 + $0x30] sm:$0xf]
    %v1945 = vld [vmem:[#allocation10 + $0x38] sm:$0xf]
    %v1946 = vld [vmem:[#allocation10 + $0x40] sm:$0xf]
    %v1947 = vld [vmem:[#allocation10 + $0x48] sm:$0xf]
    %v1948 = vld [vmem:[#allocation10 + $0x50] sm:$0xf]
    %v1949 = vld [vmem:[#allocation10 + $0x58] sm:$0xf]
    %v1950 = vld [vmem:[#allocation10 + $0x60] sm:$0xf]
    %v1951 = vld [vmem:[#allocation10 + $0x68] sm:$0xf]
    %v1952 = vld [vmem:[#allocation10 + $0x70] sm:$0xf]
    %v1953 = vld [vmem:[#allocation10 + $0x78] sm:$0xf]
    %v1954 = vld [vmem:[#allocation12 + $0x10] sm:$0x1]
    %v1956 = vlaneseq
    %v1957 = vshrl.u32 %v1956, 7
    %v1958 = vsub.s32 0, %v1957
    %v1959 = vrot.slane %v1954, %v1958
    %v1977 = vunpack.c.l.b16 %v1938
    %v1978 = vunpack.c.l.b16 %v1939
    %v1979 = vunpack.c.l.b16 %v1940
    %v1980 = vunpack.c.l.b16 %v1941
    %v1981 = vunpack.c.l.b16 %v1942
    %v1982 = vunpack.c.l.b16 %v1943
    %v1983 = vunpack.c.l.b16 %v1944
    %v1984 = vunpack.c.l.b16 %v1945
    %v1985 = vunpack.c.l.b16 %v1946
    %v1986 = vunpack.c.l.b16 %v1947
    %v1987 = vunpack.c.l.b16 %v1948
    %v1988 = vunpack.c.l.b16 %v1949
    %v1989 = vunpack.c.l.b16 %v1950
    %v1990 = vunpack.c.l.b16 %v1951
    %v1991 = vunpack.c.l.b16 %v1952
    %v1992 = vunpack.c.l.b16 %v1953
    %v1993 = vpack.c.b16 %v1978, %v1977
    %v1994 = vpack.c.b16 %v1980, %v1979
    %v1995 = vpack.c.b16 %v1982, %v1981
    %v1996 = vpack.c.b16 %v1984, %v1983
    %v1997 = vpack.c.b16 %v1986, %v1985
    %v1998 = vpack.c.b16 %v1988, %v1987
    %v1999 = vpack.c.b16 %v1990, %v1989
    %v2000 = vpack.c.b16 %v1992, %v1991
    %2009 = vmatprep.subr.bf16.mxu0 0
    %2010 = vmatpush1.bf16.msra.mxu0 %v1993
    %2011 = vmatprep.subr.bf16.mxu0 0
    %2012 = vmatpush1.bf16.msra.mxu0 %v1994
    %2013 = vmatprep.subr.bf16.mxu0 0
    %2014 = vmatpush1.bf16.msra.mxu0 %v1995
    %2015 = vmatprep.subr.bf16.mxu0 0
    %2016 = vmatpush1.bf16.msra.mxu0 %v1996
    %2017 = vmatprep.subr.bf16.mxu0 0
    %2018 = vmatpush1.bf16.msra.mxu0 %v1997
    %2019 = vmatprep.subr.bf16.mxu0 0
    %2020 = vmatpush1.bf16.msra.mxu0 %v1998
    %2021 = vmatprep.subr.bf16.mxu0 0
    %2022 = vmatpush1.bf16.msra.mxu0 %v1999
    %2023 = vmatprep.subr.bf16.mxu0 0
    %2024 = vmatpush1.bf16.msra.mxu0 %v2000
    %2025 = vmatprep.subr.bf16.mxu0 0
    %2026 = vmatpush1.bf16.msra.mxu0 0
    %2027 = vmatprep.subr.bf16.mxu0 0
    %2028 = vmatpush1.bf16.msra.mxu0 0
    %2029 = vmatprep.subr.bf16.mxu0 0
    %2030 = vmatpush1.bf16.msra.mxu0 0
    %2031 = vmatprep.subr.bf16.mxu0 0
    %2032 = vmatpush1.bf16.msra.mxu0 0
    %2033 = vmatprep.subr.bf16.mxu0 0
    %2034 = vmatpush1.bf16.msra.mxu0 0
    %2035 = vmatprep.subr.bf16.mxu0 0
    %2036 = vmatpush1.bf16.msra.mxu0 0
    %2037 = vmatprep.subr.bf16.mxu0 0
    %2038 = vmatpush1.bf16.msra.mxu0 0
    %2039 = vmatprep.subr.bf16.mxu0 0
    %2040 = vmatpush1.bf16.msra.mxu0 0
    %2041 = vmatprep.mubr.bf16.mxu0 0
    %2042 = vmatmul.mubr.bf16.gmra.mrb[0].mxu0 %v1824
    %v2043 = vpop.f32.mrb[0].mxu0
    %v2044 = vadd.f32 %v1959, %v2043
    %v2045 = vpop.f32.mrb[0].mxu0
    %v2046 = vpop.f32.mrb[0].mxu0
    %v2047 = vpop.f32.mrb[0].mxu0
    %2048 = vdwg.mxu0
    %v2049 = vld [vmem:[#allocation10 + $0x84] sm:$0xf]
    %v2050 = vld [vmem:[#allocation10 + $0x8c] sm:$0xf]
    %v2051 = vld [vmem:[#allocation10 + $0x94] sm:$0xf]
    %v2052 = vld [vmem:[#allocation10 + $0x9c] sm:$0xf]
    %v2053 = vld [vmem:[#allocation10 + $0xa4] sm:$0xf]
    %v2054 = vld [vmem:[#allocation10 + $0xac] sm:$0xf]
    %v2055 = vld [vmem:[#allocation10 + $0xb4] sm:$0xf]
    %v2056 = vld [vmem:[#allocation10 + $0xbc] sm:$0xf]
    %v2057 = vld [vmem:[#allocation10 + $0xc4] sm:$0xf]
    %v2058 = vld [vmem:[#allocation10 + $0xcc] sm:$0xf]
    %v2059 = vld [vmem:[#allocation10 + $0xd4] sm:$0xf]
    %v2060 = vld [vmem:[#allocation10 + $0xdc] sm:$0xf]
    %v2061 = vld [vmem:[#allocation10 + $0xe4] sm:$0xf]
    %v2062 = vld [vmem:[#allocation10 + $0xec] sm:$0xf]
    %v2063 = vld [vmem:[#allocation10 + $0xf4] sm:$0xf]
    %v2064 = vld [vmem:[#allocation10 + $0xfc] sm:$0xf]
    %v2065 = vld [vmem:[#allocation12 + $0x11] sm:$0x1]
    %v2067 = vlaneseq
    %v2068 = vshrl.u32 %v2067, 7
    %v2069 = vsub.s32 0, %v2068
    %v2070 = vrot.slane %v2065, %v2069
    %v2088 = vunpack.c.l.b16 %v2049
    %v2089 = vunpack.c.l.b16 %v2050
    %v2090 = vunpack.c.l.b16 %v2051
    %v2091 = vunpack.c.l.b16 %v2052
    %v2092 = vunpack.c.l.b16 %v2053
    %v2093 = vunpack.c.l.b16 %v2054
    %v2094 = vunpack.c.l.b16 %v2055
    %v2095 = vunpack.c.l.b16 %v2056
    %v2096 = vunpack.c.l.b16 %v2057
    %v2097 = vunpack.c.l.b16 %v2058
    %v2098 = vunpack.c.l.b16 %v2059
    %v2099 = vunpack.c.l.b16 %v2060
    %v2100 = vunpack.c.l.b16 %v2061
    %v2101 = vunpack.c.l.b16 %v2062
    %v2102 = vunpack.c.l.b16 %v2063
    %v2103 = vunpack.c.l.b16 %v2064
    %v2104 = vpack.c.b16 %v2089, %v2088
    %v2105 = vpack.c.b16 %v2091, %v2090
    %v2106 = vpack.c.b16 %v2093, %v2092
    %v2107 = vpack.c.b16 %v2095, %v2094
    %v2108 = vpack.c.b16 %v2097, %v2096
    %v2109 = vpack.c.b16 %v2099, %v2098
    %v2110 = vpack.c.b16 %v2101, %v2100
    %v2111 = vpack.c.b16 %v2103, %v2102
    %2120 = vmatprep.subr.bf16.mxu0 0
    %2121 = vmatpush1.bf16.msra.mxu0 %v2104
    %2122 = vmatprep.subr.bf16.mxu0 0
    %2123 = vmatpush1.bf16.msra.mxu0 %v2105
    %2124 = vmatprep.subr.bf16.mxu0 0
    %2125 = vmatpush1.bf16.msra.mxu0 %v2106
    %2126 = vmatprep.subr.bf16.mxu0 0
    %2127 = vmatpush1.bf16.msra.mxu0 %v2107
    %2128 = vmatprep.subr.bf16.mxu0 0
    %2129 = vmatpush1.bf16.msra.mxu0 %v2108
    %2130 = vmatprep.subr.bf16.mxu0 0
    %2131 = vmatpush1.bf16.msra.mxu0 %v2109
    %2132 = vmatprep.subr.bf16.mxu0 0
    %2133 = vmatpush1.bf16.msra.mxu0 %v2110
    %2134 = vmatprep.subr.bf16.mxu0 0
    %2135 = vmatpush1.bf16.msra.mxu0 %v2111
    %2136 = vmatprep.subr.bf16.mxu0 0
    %2137 = vmatpush1.bf16.msra.mxu0 0
    %2138 = vmatprep.subr.bf16.mxu0 0
    %2139 = vmatpush1.bf16.msra.mxu0 0
    %2140 = vmatprep.subr.bf16.mxu0 0
    %2141 = vmatpush1.bf16.msra.mxu0 0
    %2142 = vmatprep.subr.bf16.mxu0 0
    %2143 = vmatpush1.bf16.msra.mxu0 0
    %2144 = vmatprep.subr.bf16.mxu0 0
    %2145 = vmatpush1.bf16.msra.mxu0 0
    %2146 = vmatprep.subr.bf16.mxu0 0
    %2147 = vmatpush1.bf16.msra.mxu0 0
    %2148 = vmatprep.subr.bf16.mxu0 0
    %2149 = vmatpush1.bf16.msra.mxu0 0
    %2150 = vmatprep.subr.bf16.mxu0 0
    %2151 = vmatpush1.bf16.msra.mxu0 0
    %2152 = vmatprep.mubr.bf16.mxu0 0
    %2153 = vmatmul.mubr.bf16.gmra.mrb[0].mxu0 %v1937
    %v2154 = vpop.f32.mrb[0].mxu0
    %v2155 = vadd.f32 %v2070, %v2154
    %v2156 = vpop.f32.mrb[0].mxu0
    %v2157 = vpop.f32.mrb[0].mxu0
    %v2158 = vpop.f32.mrb[0].mxu0
    %2159 = vdwg.mxu0
    %v2160 = vlaneseq
    %v2161 = vand.u32 %v2160, 127
    %vm2162 = vcmp.lt.s32.totalorder %v2161, 8
    %v2163 = vsel %vm2162, %v2044, -1e+30
    %2164 = vmax.xlane.f32.xlu0 %v2163
    %v2165 = vpop.xlane.xlu0 %2164
    %v2166 = vsub.f32 %v2163, %v2165
    %v2167 = vmul.f32 %v2166, 1.442695
    %v2168 = vpow.pop %v2167
    %v2169 = vsel %vm2162, %v2168, 0.0
    %2170 = vadd.xlane.f32.xlu0 %v2169
    %v2171 = vpop.xlane.xlu0 %2170
    %v2172 = vlog2.pop %v2171
    %v2173 = vmul.f32 %v2172, 0.6931472
    %v2174 = vadd.f32 %v2165, %v2173
    %v2175 = vsub.f32 %v2163, %v2174
    %vm2176 = vcmp.eq.s32.totalorder %v2161, 127
    %2178 = vset.pattern.permute.xlu0 0
    %2179 = vperm.xlu0 %2178, %v2155
    %v2180 = vpop.permute.xlu0 %2179
    %v2182 = vsel %vm2176, %v2180, %v2175
    %2183 = vst [vmem:[%s7] sm:$0xff] %v2182
    // Predicated region
    $region58: #{actor_critic_forward.1} parent=1 // pred_check
      _
    $region59: #{actor_critic_forward.1} parent=1 // pred_check_branch
      %2185 = sbr.rel (0) target = $region61
    $region60: #{actor_critic_forward.1} parent=1 // pred_region
      _
    $region61: #{actor_critic_forward.1} parent=1 // pred_fallthru
      _
    // Predicated region
    $region62: #{actor_critic_forward.1} parent=1 // pred_check
      _
    $region63: #{actor_critic_forward.1} parent=1 // pred_check_branch
      %2187 = sbr.rel (0) target = $region65
    $region64: #{actor_critic_forward.1} parent=1 // pred_region
      _
    $region65: #{actor_critic_forward.1} parent=1 // pred_fallthru
      _
    %2188 = vsyncpa [#allocation3], 1
    %2189 = vsyncpa [#allocation5], 1
    %2190 = vsyncpa [#allocation8], 1
    %2191 = vsyncpa [#allocation11], 1

</llo_original>
